<compile_context>
chip_gen: v6e
topology: v6e:2x2x1
jax: 0.10.0
libtpu: 0.0.40
codegen_flags: <defaults>
</compile_context>

<pallas_src>
import functools

import jax
import jax.numpy as jnp
import numpy as np
from jax import lax
from jax.experimental import pallas as pl
from jax.experimental.pallas import tpu as pltpu


def _fused_conv_block_kernel(x_ref, w1_ref, b1_ref, w2_ref, b2_ref, o_ref,
                             *, H, W):
    """Fused [conv3x3 + bias + ReLU] x 2 for a block of B images (NCHW-flat).

    x_ref  : (B, Cin,  H*W)   lane-dense input block (spatial on lanes)
    w1_ref : (9, Cout, Cin)   stage-1 taps (index = ky*3+kx), BN scale folded
    b1_ref : (Cout, 1)        stage-1 fused bias, f32
    w2_ref : (9, Cout, Cout)  stage-2 taps, BN scale folded
    b2_ref : (Cout, 1)        stage-2 fused bias, f32
    o_ref  : (B, Cout, H*W)   lane-dense NCHW output block
    """
    B = x_ref.shape[0]
    HW = H * W
    # Lane-aligned zero extension, large enough to cover a +/-(W+1) tap shift.
    PADL = ((W + 1 + 127) // 128) * 128

    # W-edge masks: computed once, shared by both stages and all B images.
    col = lax.broadcasted_iota(jnp.int32, (1, HW), 1) % W
    left_ok = col > 0            # column w-1 exists
    right_ok = col < (W - 1)     # column w+1 exists

    # Hoist all weight/bias loads out of the per-image loop.
    w1 = w1_ref[...]
    w2 = w2_ref[...]
    b1 = b1_ref[...]
    b2 = b2_ref[...]

    def conv3x3(x_flat, w_taps, bias):
        # x_flat: (C_in, HW). Zero-extend along lanes (128-aligned pieces, so
        # the concat is a register-level placement, not a repack); the 9 taps
        # are lane-shifted windows of this extended row.  Vertical (dy) halo
        # is covered by the zero extension; horizontal (dx) edges are masked.
        cin = x_flat.shape[0]
        zpad = jnp.zeros((cin, PADL), dtype=x_flat.dtype)
        p = jnp.concatenate([zpad, x_flat, zpad], axis=1)   # (C_in, HW+2*PADL)
        acc = None
        for ky in range(3):
            for kx in range(3):
                start = PADL + (ky - 1) * W + (kx - 1)
                tap = p[:, start:start + HW]                 # XLU lane shift
                if kx == 0:
                    tap = jnp.where(left_ok, tap, jnp.zeros_like(tap))
                elif kx == 2:
                    tap = jnp.where(right_ok, tap, jnp.zeros_like(tap))
                # (Cout, Cin) @ (Cin, HW) -> (Cout, HW), f32 accumulation.
                part = jnp.dot(w_taps[ky * 3 + kx], tap,
                               preferred_element_type=jnp.float32)
                acc = part if acc is None else acc + part
        return jnp.maximum(acc + bias, 0.0)                  # (C_out, HW) f32

    for b in range(B):                    # static unroll over images per step
        y1 = conv3x3(x_ref[b], w1, b1)    # stage-1 activation stays on-chip
        y2 = conv3x3(y1, w2, b2)
        o_ref[b] = y2.astype(o_ref.dtype)


def _pick_images_per_step(n):
    # Batch images per grid step to amortize the ~0.35us/step pipeline
    # overhead, but keep >= 2 grid steps so input/output DMAs overlap compute
    # (and both v7x TensorCores get work).
    for d in (8, 4, 2):
        if n % d == 0 and n // d >= 2:
            return d
    return 1


def _conv_block_forward(x_nchw, w1_taps, b1, w2_taps, b2):
    """conv_block forward, NCHW in / NCHW out, no wrapper transposes."""
    N, Cin, H, W = x_nchw.shape
    Cout = w1_taps.shape[1]
    HW = H * W
    dt = x_nchw.dtype

    x_flat = x_nchw.reshape(N, Cin, HW)        # free reshape (NCHW kept)

    B = _pick_images_per_step(N)
    grid = (N // B,)

    # VMEM budget from actual block sizes (double-buffered in/out blocks +
    # weights + f32 working set), clamped to a safe range.
    itemsize = jnp.dtype(dt).itemsize
    in_blk = B * Cin * HW * itemsize
    out_blk = B * Cout * HW * itemsize
    w_bytes = (9 * Cout * Cin + 9 * Cout * Cout) * itemsize + 2 * Cout * 4
    work = 4 * (Cin + 4 * Cout) * (HW + 2 * 128)
    vmem_limit = int(min(100 * 2**20,
                         max(32 * 2**20,
                             2 * (in_blk + out_blk) + 2 * w_bytes + work)))

    kernel = functools.partial(_fused_conv_block_kernel, H=H, W=W)

    # TODO(synk): for large H*W / C (e.g. C>=128, H=W>=256) add a row-strip
    #             grid axis with a 2-row halo (stage-1 recompute) so per-step
    #             blocks stay inside v7x's 64 MiB VMEM; blocks are tiny at
    #             the channel counts exercised here.
    # TODO(synk): single-buffer the constant-index weight/bias blocks with
    #             pipeline_mode=pl.Buffered(1) for large channel counts; at
    #             these sizes double-buffering them costs < 20 KiB.
    out_flat = pl.pallas_call(
        kernel,
        out_shape=jax.ShapeDtypeStruct((N, Cout, HW), dt),
        grid_spec=pltpu.PrefetchScalarGridSpec(
            num_scalar_prefetch=0,
            grid=grid,
            in_specs=[
                pl.BlockSpec((B, Cin, HW), lambda n: (n, 0, 0)),
                pl.BlockSpec((9, Cout, Cin), lambda n: (0, 0, 0)),
                pl.BlockSpec((Cout, 1), lambda n: (0, 0)),
                pl.BlockSpec((9, Cout, Cout), lambda n: (0, 0, 0)),
                pl.BlockSpec((Cout, 1), lambda n: (0, 0)),
            ],
            out_specs=pl.BlockSpec((B, Cout, HW), lambda n: (n, 0, 0)),
        ),
        compiler_params=pltpu.CompilerParams(
            dimension_semantics=("parallel",),
            vmem_limit_bytes=vmem_limit),
    )(x_flat,
      w1_taps.astype(dt), b1.reshape(Cout, 1).astype(jnp.float32),
      w2_taps.astype(dt), b2.reshape(Cout, 1).astype(jnp.float32))

    return out_flat.reshape(N, Cout, H, W)     # free split of the last dim


conv_block_forward = jax.jit(_conv_block_forward)


def make_conv_block_params(key, ch_in, ch_out):
    """Deterministic synthetic parameters mirroring conv_block.__init__."""
    ks = jax.random.split(key, 12)
    eps = 1e-5

    def stage(kw, kb, kg, kbeta, km, kv, cin, cout):
        w_oihw = jax.random.normal(kw, (cout, cin, 3, 3), jnp.float32) * 0.1
        b_conv = jax.random.normal(kb, (cout,), jnp.float32) * 0.1
        gamma = 1.0 + 0.1 * jax.random.normal(kg, (cout,), jnp.float32)
        beta = 0.1 * jax.random.normal(kbeta, (cout,), jnp.float32)
        r_mean = 0.1 * jax.random.normal(km, (cout,), jnp.float32)
        r_var = jnp.abs(1.0 + 0.1 * jax.random.normal(kv, (cout,), jnp.float32))
        scale_bn = gamma / jnp.sqrt(r_var + eps)
        bias_fused = (b_conv - r_mean) * scale_bn + beta
        # Fold BN scale into the conv weights; lay taps out major:
        # OIHW -> (ky, kx, O, I) -> (9, O, I), tap index = ky*3 + kx.
        w_folded = w_oihw * scale_bn[:, None, None, None]
        w_taps = jnp.transpose(w_folded, (2, 3, 0, 1)).reshape(9, cout, cin)
        return dict(w_taps=w_taps, bias=bias_fused,
                    w_oihw=w_oihw, b_conv=b_conv, gamma=gamma, beta=beta,
                    mean=r_mean, var=r_var)

    p1 = stage(ks[0], ks[1], ks[2], ks[3], ks[4], ks[5], ch_in, ch_out)
    p2 = stage(ks[6], ks[7], ks[8], ks[9], ks[10], ks[11], ch_out, ch_out)
    return p1, p2


def _reference_forward(x_nchw, p1, p2):
    """Plain-JAX reference (eval-mode BN) for correctness checking."""
    eps = 1e-5

    def stage(x, p):
        y = lax.conv_general_dilated(
            x, p["w_oihw"], window_strides=(1, 1), padding=((1, 1), (1, 1)),
            dimension_numbers=("NCHW", "OIHW", "NCHW"))
        y = y + p["b_conv"][None, :, None, None]
        y = (y - p["mean"][None, :, None, None]) / jnp.sqrt(
            p["var"][None, :, None, None] + eps)
        y = y * p["gamma"][None, :, None, None] + p["beta"][None, :, None, None]
        return jnp.maximum(y, 0.0)

    return stage(stage(x_nchw, p1), p2)


if __name__ == "__main__":
    key = jax.random.PRNGKey(0)
    k_x, k_p = jax.random.split(key)

    N, C_IN, C_OUT, H, W = 2, 4, 8, 16, 16
    x = jax.random.normal(k_x, (N, C_IN, H, W), jnp.float32)

    p1, p2 = make_conv_block_params(k_p, C_IN, C_OUT)

    out = conv_block_forward(x, p1["w_taps"], p1["bias"],
                             p2["w_taps"], p2["bias"])
    out = jax.block_until_ready(out)

    ref = jax.block_until_ready(_reference_forward(x, p1, p2))
    np.testing.assert_allclose(np.asarray(out), np.asarray(ref),
                               rtol=1e-4, atol=1e-4)

    assert out.shape == (N, C_OUT, H, W)
    print("KERNEL_OK")
</pallas_src>

<mosaic_0001>
module attributes {stable_mosaic.version = 11 : i64} {
  func.func @_fused_conv_block_kernel(%arg0: i32, %arg1: memref<1x4x256xf32, #tpu.memory_space<vmem>>, %arg2: memref<9x8x4xf32, #tpu.memory_space<vmem>>, %arg3: memref<8x1xf32, #tpu.memory_space<vmem>>, %arg4: memref<9x8x8xf32, #tpu.memory_space<vmem>>, %arg5: memref<8x1xf32, #tpu.memory_space<vmem>>, %arg6: memref<1x8x256xf32, #tpu.memory_space<vmem>>) attributes {dimension_semantics = [#tpu.dimension_semantics<parallel>], iteration_bounds = array<i64: 2>, scalar_prefetch = 0 : i64, scratch_operands = 0 : i64, tpu.core_type = #tpu.core_type<tc>, window_params = [{transform_indices = @transform_0, window_bounds = array<i64: 1, 4, 256>}, {pipeline_mode = #tpu.pipeline_mode<synchronous>, transform_indices = @transform_1, window_bounds = array<i64: 9, 8, 4>}, {pipeline_mode = #tpu.pipeline_mode<synchronous>, transform_indices = @transform_2, window_bounds = array<i64: 8, 1>}, {pipeline_mode = #tpu.pipeline_mode<synchronous>, transform_indices = @transform_3, window_bounds = array<i64: 9, 8, 8>}, {pipeline_mode = #tpu.pipeline_mode<synchronous>, transform_indices = @transform_4, window_bounds = array<i64: 8, 1>}, {transform_indices = @transform_5, window_bounds = array<i64: 1, 8, 256>}]} {
    %0 = tpu.iota {dimensions = array<i32: 1>} : vector<1x256xi32>
    %c16_i32 = arith.constant 16 : i32
    %c0_i32 = arith.constant 0 : i32
    %1 = arith.cmpi eq, %c16_i32, %c0_i32 : i32
    %c1_i32 = arith.constant 1 : i32
    %2 = arith.select %1, %c1_i32, %c16_i32 : i32
    %3 = vector.broadcast %2 : i32 to vector<1x256xi32>
    %4 = arith.remsi %0, %3 : vector<1x256xi32>
    %c0_i32_0 = arith.constant 0 : i32
    %5 = vector.broadcast %c0_i32_0 : i32 to vector<1x256xi32>
    %6 = arith.cmpi ne, %4, %5 : vector<1x256xi32>
    %c0_i32_1 = arith.constant 0 : i32
    %7 = vector.broadcast %c0_i32_1 : i32 to vector<1x256xi32>
    %8 = arith.cmpi slt, %4, %7 : vector<1x256xi32>
    %c0_i32_2 = arith.constant 0 : i32
    %9 = arith.cmpi slt, %2, %c0_i32_2 : i32
    %10 = vector.broadcast %9 : i1 to vector<1x256xi1>
    %11 = vector.broadcast %10 : vector<1x256xi1> to vector<1x256xi1>
    %12 = arith.xori %8, %11 : vector<1x256xi1>
    %13 = arith.andi %12, %6 : vector<1x256xi1>
    %14 = vector.broadcast %2 : i32 to vector<1x256xi32>
    %15 = arith.addi %4, %14 : vector<1x256xi32>
    %16 = arith.select %13, %15, %4 : vector<1x256xi1>, vector<1x256xi32>
    %c0_i32_3 = arith.constant 0 : i32
    %17 = vector.broadcast %c0_i32_3 : i32 to vector<1x256xi32>
    %18 = arith.cmpi sgt, %16, %17 : vector<1x256xi32>
    %c15_i32 = arith.constant 15 : i32
    %19 = vector.broadcast %c15_i32 : i32 to vector<1x256xi32>
    %20 = arith.cmpi slt, %16, %19 : vector<1x256xi32>
    %c0 = arith.constant 0 : index
    %c0_4 = arith.constant 0 : index
    %c0_5 = arith.constant 0 : index
    %21 = vector.load %arg2[%c0, %c0_4, %c0_5] : memref<9x8x4xf32, #tpu.memory_space<vmem>>, vector<9x8x4xf32>
    %c0_6 = arith.constant 0 : index
    %c0_7 = arith.constant 0 : index
    %c0_8 = arith.constant 0 : index
    %22 = vector.load %arg4[%c0_6, %c0_7, %c0_8] : memref<9x8x8xf32, #tpu.memory_space<vmem>>, vector<9x8x8xf32>
    %c0_9 = arith.constant 0 : index
    %c0_10 = arith.constant 0 : index
    %23 = vector.load %arg3[%c0_9, %c0_10] : memref<8x1xf32, #tpu.memory_space<vmem>>, vector<8x1xf32>
    %c0_11 = arith.constant 0 : index
    %c0_12 = arith.constant 0 : index
    %24 = vector.load %arg5[%c0_11, %c0_12] : memref<8x1xf32, #tpu.memory_space<vmem>>, vector<8x1xf32>
    %c0_13 = arith.constant 0 : index
    %c0_14 = arith.constant 0 : index
    %c0_15 = arith.constant 0 : index
    %25 = vector.load %arg1[%c0_13, %c0_14, %c0_15] : memref<1x4x256xf32, #tpu.memory_space<vmem>>, vector<1x4x256xf32>
    %26 = vector.shape_cast %25 : vector<1x4x256xf32> to vector<4x256xf32>
    %cst = arith.constant 0.000000e+00 : f32
    %27 = vector.broadcast %cst : f32 to vector<4x128xf32>
    %28 = tpu.concatenate %27, %26, %27 in 1 : vector<4x128xf32>, vector<4x256xf32>, vector<4x128xf32> -> vector<4x512xf32>
    %29 = vector.extract_strided_slice %28 {offsets = [0, 111], sizes = [4, 256], strides = [1, 1]} : vector<4x512xf32> to vector<4x256xf32>
    %cst_16 = arith.constant 0.000000e+00 : f32
    %30 = vector.broadcast %cst_16 : f32 to vector<4x256xf32>
    %31 = vector.shape_cast %18 : vector<1x256xi1> to vector<1x256xi1>
    %32 = vector.broadcast %31 : vector<1x256xi1> to vector<4x256xi1>
    %33 = arith.select %32, %29, %30 : vector<4x256xi1>, vector<4x256xf32>
    %34 = vector.extract_strided_slice %21 {offsets = [0, 0, 0], sizes = [1, 8, 4], strides = [1, 1, 1]} : vector<9x8x4xf32> to vector<1x8x4xf32>
    %35 = vector.shape_cast %34 : vector<1x8x4xf32> to vector<8x4xf32>
    %cst_17 = arith.constant dense<0.000000e+00> : vector<8x256xf32>
    %36 = tpu.matmul %35, %33, %cst_17 {dimension_numbers = #tpu.dot_dimension_numbers<[1], [0], [0], [1], [0, 0, 1, 1], [], []>} : vector<8x4xf32>, vector<4x256xf32>, vector<8x256xf32> -> vector<8x256xf32>
    %37 = vector.extract_strided_slice %28 {offsets = [0, 112], sizes = [4, 256], strides = [1, 1]} : vector<4x512xf32> to vector<4x256xf32>
    %38 = vector.extract_strided_slice %21 {offsets = [1, 0, 0], sizes = [1, 8, 4], strides = [1, 1, 1]} : vector<9x8x4xf32> to vector<1x8x4xf32>
    %39 = vector.shape_cast %38 : vector<1x8x4xf32> to vector<8x4xf32>
    %cst_18 = arith.constant dense<0.000000e+00> : vector<8x256xf32>
    %40 = tpu.matmul %39, %37, %cst_18 {dimension_numbers = #tpu.dot_dimension_numbers<[1], [0], [0], [1], [0, 0, 1, 1], [], []>} : vector<8x4xf32>, vector<4x256xf32>, vector<8x256xf32> -> vector<8x256xf32>
    %41 = arith.addf %36, %40 : vector<8x256xf32>
    %42 = vector.extract_strided_slice %28 {offsets = [0, 113], sizes = [4, 256], strides = [1, 1]} : vector<4x512xf32> to vector<4x256xf32>
    %cst_19 = arith.constant 0.000000e+00 : f32
    %43 = vector.broadcast %cst_19 : f32 to vector<4x256xf32>
    %44 = vector.shape_cast %20 : vector<1x256xi1> to vector<1x256xi1>
    %45 = vector.broadcast %44 : vector<1x256xi1> to vector<4x256xi1>
    %46 = arith.select %45, %42, %43 : vector<4x256xi1>, vector<4x256xf32>
    %47 = vector.extract_strided_slice %21 {offsets = [2, 0, 0], sizes = [1, 8, 4], strides = [1, 1, 1]} : vector<9x8x4xf32> to vector<1x8x4xf32>
    %48 = vector.shape_cast %47 : vector<1x8x4xf32> to vector<8x4xf32>
    %cst_20 = arith.constant dense<0.000000e+00> : vector<8x256xf32>
    %49 = tpu.matmul %48, %46, %cst_20 {dimension_numbers = #tpu.dot_dimension_numbers<[1], [0], [0], [1], [0, 0, 1, 1], [], []>} : vector<8x4xf32>, vector<4x256xf32>, vector<8x256xf32> -> vector<8x256xf32>
    %50 = arith.addf %41, %49 : vector<8x256xf32>
    %51 = vector.extract_strided_slice %28 {offsets = [0, 127], sizes = [4, 256], strides = [1, 1]} : vector<4x512xf32> to vector<4x256xf32>
    %cst_21 = arith.constant 0.000000e+00 : f32
    %52 = vector.broadcast %cst_21 : f32 to vector<4x256xf32>
    %53 = vector.shape_cast %18 : vector<1x256xi1> to vector<1x256xi1>
    %54 = vector.broadcast %53 : vector<1x256xi1> to vector<4x256xi1>
    %55 = arith.select %54, %51, %52 : vector<4x256xi1>, vector<4x256xf32>
    %56 = vector.extract_strided_slice %21 {offsets = [3, 0, 0], sizes = [1, 8, 4], strides = [1, 1, 1]} : vector<9x8x4xf32> to vector<1x8x4xf32>
    %57 = vector.shape_cast %56 : vector<1x8x4xf32> to vector<8x4xf32>
    %cst_22 = arith.constant dense<0.000000e+00> : vector<8x256xf32>
    %58 = tpu.matmul %57, %55, %cst_22 {dimension_numbers = #tpu.dot_dimension_numbers<[1], [0], [0], [1], [0, 0, 1, 1], [], []>} : vector<8x4xf32>, vector<4x256xf32>, vector<8x256xf32> -> vector<8x256xf32>
    %59 = arith.addf %50, %58 : vector<8x256xf32>
    %60 = vector.extract_strided_slice %28 {offsets = [0, 128], sizes = [4, 256], strides = [1, 1]} : vector<4x512xf32> to vector<4x256xf32>
    %61 = vector.extract_strided_slice %21 {offsets = [4, 0, 0], sizes = [1, 8, 4], strides = [1, 1, 1]} : vector<9x8x4xf32> to vector<1x8x4xf32>
    %62 = vector.shape_cast %61 : vector<1x8x4xf32> to vector<8x4xf32>
    %cst_23 = arith.constant dense<0.000000e+00> : vector<8x256xf32>
    %63 = tpu.matmul %62, %60, %cst_23 {dimension_numbers = #tpu.dot_dimension_numbers<[1], [0], [0], [1], [0, 0, 1, 1], [], []>} : vector<8x4xf32>, vector<4x256xf32>, vector<8x256xf32> -> vector<8x256xf32>
    %64 = arith.addf %59, %63 : vector<8x256xf32>
    %65 = vector.extract_strided_slice %28 {offsets = [0, 129], sizes = [4, 256], strides = [1, 1]} : vector<4x512xf32> to vector<4x256xf32>
    %cst_24 = arith.constant 0.000000e+00 : f32
    %66 = vector.broadcast %cst_24 : f32 to vector<4x256xf32>
    %67 = vector.shape_cast %20 : vector<1x256xi1> to vector<1x256xi1>
    %68 = vector.broadcast %67 : vector<1x256xi1> to vector<4x256xi1>
    %69 = arith.select %68, %65, %66 : vector<4x256xi1>, vector<4x256xf32>
    %70 = vector.extract_strided_slice %21 {offsets = [5, 0, 0], sizes = [1, 8, 4], strides = [1, 1, 1]} : vector<9x8x4xf32> to vector<1x8x4xf32>
    %71 = vector.shape_cast %70 : vector<1x8x4xf32> to vector<8x4xf32>
    %cst_25 = arith.constant dense<0.000000e+00> : vector<8x256xf32>
    %72 = tpu.matmul %71, %69, %cst_25 {dimension_numbers = #tpu.dot_dimension_numbers<[1], [0], [0], [1], [0, 0, 1, 1], [], []>} : vector<8x4xf32>, vector<4x256xf32>, vector<8x256xf32> -> vector<8x256xf32>
    %73 = arith.addf %64, %72 : vector<8x256xf32>
    %74 = vector.extract_strided_slice %28 {offsets = [0, 143], sizes = [4, 256], strides = [1, 1]} : vector<4x512xf32> to vector<4x256xf32>
    %cst_26 = arith.constant 0.000000e+00 : f32
    %75 = vector.broadcast %cst_26 : f32 to vector<4x256xf32>
    %76 = vector.shape_cast %18 : vector<1x256xi1> to vector<1x256xi1>
    %77 = vector.broadcast %76 : vector<1x256xi1> to vector<4x256xi1>
    %78 = arith.select %77, %74, %75 : vector<4x256xi1>, vector<4x256xf32>
    %79 = vector.extract_strided_slice %21 {offsets = [6, 0, 0], sizes = [1, 8, 4], strides = [1, 1, 1]} : vector<9x8x4xf32> to vector<1x8x4xf32>
    %80 = vector.shape_cast %79 : vector<1x8x4xf32> to vector<8x4xf32>
    %cst_27 = arith.constant dense<0.000000e+00> : vector<8x256xf32>
    %81 = tpu.matmul %80, %78, %cst_27 {dimension_numbers = #tpu.dot_dimension_numbers<[1], [0], [0], [1], [0, 0, 1, 1], [], []>} : vector<8x4xf32>, vector<4x256xf32>, vector<8x256xf32> -> vector<8x256xf32>
    %82 = arith.addf %73, %81 : vector<8x256xf32>
    %83 = vector.extract_strided_slice %28 {offsets = [0, 144], sizes = [4, 256], strides = [1, 1]} : vector<4x512xf32> to vector<4x256xf32>
    %84 = vector.extract_strided_slice %21 {offsets = [7, 0, 0], sizes = [1, 8, 4], strides = [1, 1, 1]} : vector<9x8x4xf32> to vector<1x8x4xf32>
    %85 = vector.shape_cast %84 : vector<1x8x4xf32> to vector<8x4xf32>
    %cst_28 = arith.constant dense<0.000000e+00> : vector<8x256xf32>
    %86 = tpu.matmul %85, %83, %cst_28 {dimension_numbers = #tpu.dot_dimension_numbers<[1], [0], [0], [1], [0, 0, 1, 1], [], []>} : vector<8x4xf32>, vector<4x256xf32>, vector<8x256xf32> -> vector<8x256xf32>
    %87 = arith.addf %82, %86 : vector<8x256xf32>
    %88 = vector.extract_strided_slice %28 {offsets = [0, 145], sizes = [4, 256], strides = [1, 1]} : vector<4x512xf32> to vector<4x256xf32>
    %cst_29 = arith.constant 0.000000e+00 : f32
    %89 = vector.broadcast %cst_29 : f32 to vector<4x256xf32>
    %90 = vector.shape_cast %20 : vector<1x256xi1> to vector<1x256xi1>
    %91 = vector.broadcast %90 : vector<1x256xi1> to vector<4x256xi1>
    %92 = arith.select %91, %88, %89 : vector<4x256xi1>, vector<4x256xf32>
    %93 = vector.extract_strided_slice %21 {offsets = [8, 0, 0], sizes = [1, 8, 4], strides = [1, 1, 1]} : vector<9x8x4xf32> to vector<1x8x4xf32>
    %94 = vector.shape_cast %93 : vector<1x8x4xf32> to vector<8x4xf32>
    %cst_30 = arith.constant dense<0.000000e+00> : vector<8x256xf32>
    %95 = tpu.matmul %94, %92, %cst_30 {dimension_numbers = #tpu.dot_dimension_numbers<[1], [0], [0], [1], [0, 0, 1, 1], [], []>} : vector<8x4xf32>, vector<4x256xf32>, vector<8x256xf32> -> vector<8x256xf32>
    %96 = arith.addf %87, %95 : vector<8x256xf32>
    %97 = vector.broadcast %23 : vector<8x1xf32> to vector<8x256xf32>
    %98 = arith.addf %96, %97 : vector<8x256xf32>
    %cst_31 = arith.constant 0.000000e+00 : f32
    %99 = vector.broadcast %cst_31 : f32 to vector<8x256xf32>
    %100 = arith.maximumf %98, %99 : vector<8x256xf32>
    %cst_32 = arith.constant 0.000000e+00 : f32
    %101 = vector.broadcast %cst_32 : f32 to vector<8x128xf32>
    %102 = tpu.concatenate %101, %100, %101 in 1 : vector<8x128xf32>, vector<8x256xf32>, vector<8x128xf32> -> vector<8x512xf32>
    %103 = vector.extract_strided_slice %102 {offsets = [0, 111], sizes = [8, 256], strides = [1, 1]} : vector<8x512xf32> to vector<8x256xf32>
    %cst_33 = arith.constant 0.000000e+00 : f32
    %104 = vector.broadcast %cst_33 : f32 to vector<8x256xf32>
    %105 = vector.shape_cast %18 : vector<1x256xi1> to vector<1x256xi1>
    %106 = vector.broadcast %105 : vector<1x256xi1> to vector<8x256xi1>
    %107 = arith.select %106, %103, %104 : vector<8x256xi1>, vector<8x256xf32>
    %108 = vector.extract_strided_slice %22 {offsets = [0, 0, 0], sizes = [1, 8, 8], strides = [1, 1, 1]} : vector<9x8x8xf32> to vector<1x8x8xf32>
    %109 = vector.shape_cast %108 : vector<1x8x8xf32> to vector<8x8xf32>
    %cst_34 = arith.constant dense<0.000000e+00> : vector<8x256xf32>
    %110 = tpu.matmul %109, %107, %cst_34 {dimension_numbers = #tpu.dot_dimension_numbers<[1], [0], [0], [1], [0, 0, 1, 1], [], []>} : vector<8x8xf32>, vector<8x256xf32>, vector<8x256xf32> -> vector<8x256xf32>
    %111 = vector.extract_strided_slice %102 {offsets = [0, 112], sizes = [8, 256], strides = [1, 1]} : vector<8x512xf32> to vector<8x256xf32>
    %112 = vector.extract_strided_slice %22 {offsets = [1, 0, 0], sizes = [1, 8, 8], strides = [1, 1, 1]} : vector<9x8x8xf32> to vector<1x8x8xf32>
    %113 = vector.shape_cast %112 : vector<1x8x8xf32> to vector<8x8xf32>
    %cst_35 = arith.constant dense<0.000000e+00> : vector<8x256xf32>
    %114 = tpu.matmul %113, %111, %cst_35 {dimension_numbers = #tpu.dot_dimension_numbers<[1], [0], [0], [1], [0, 0, 1, 1], [], []>} : vector<8x8xf32>, vector<8x256xf32>, vector<8x256xf32> -> vector<8x256xf32>
    %115 = arith.addf %110, %114 : vector<8x256xf32>
    %116 = vector.extract_strided_slice %102 {offsets = [0, 113], sizes = [8, 256], strides = [1, 1]} : vector<8x512xf32> to vector<8x256xf32>
    %cst_36 = arith.constant 0.000000e+00 : f32
    %117 = vector.broadcast %cst_36 : f32 to vector<8x256xf32>
    %118 = vector.shape_cast %20 : vector<1x256xi1> to vector<1x256xi1>
    %119 = vector.broadcast %118 : vector<1x256xi1> to vector<8x256xi1>
    %120 = arith.select %119, %116, %117 : vector<8x256xi1>, vector<8x256xf32>
    %121 = vector.extract_strided_slice %22 {offsets = [2, 0, 0], sizes = [1, 8, 8], strides = [1, 1, 1]} : vector<9x8x8xf32> to vector<1x8x8xf32>
    %122 = vector.shape_cast %121 : vector<1x8x8xf32> to vector<8x8xf32>
    %cst_37 = arith.constant dense<0.000000e+00> : vector<8x256xf32>
    %123 = tpu.matmul %122, %120, %cst_37 {dimension_numbers = #tpu.dot_dimension_numbers<[1], [0], [0], [1], [0, 0, 1, 1], [], []>} : vector<8x8xf32>, vector<8x256xf32>, vector<8x256xf32> -> vector<8x256xf32>
    %124 = arith.addf %115, %123 : vector<8x256xf32>
    %125 = vector.extract_strided_slice %102 {offsets = [0, 127], sizes = [8, 256], strides = [1, 1]} : vector<8x512xf32> to vector<8x256xf32>
    %cst_38 = arith.constant 0.000000e+00 : f32
    %126 = vector.broadcast %cst_38 : f32 to vector<8x256xf32>
    %127 = vector.shape_cast %18 : vector<1x256xi1> to vector<1x256xi1>
    %128 = vector.broadcast %127 : vector<1x256xi1> to vector<8x256xi1>
    %129 = arith.select %128, %125, %126 : vector<8x256xi1>, vector<8x256xf32>
    %130 = vector.extract_strided_slice %22 {offsets = [3, 0, 0], sizes = [1, 8, 8], strides = [1, 1, 1]} : vector<9x8x8xf32> to vector<1x8x8xf32>
    %131 = vector.shape_cast %130 : vector<1x8x8xf32> to vector<8x8xf32>
    %cst_39 = arith.constant dense<0.000000e+00> : vector<8x256xf32>
    %132 = tpu.matmul %131, %129, %cst_39 {dimension_numbers = #tpu.dot_dimension_numbers<[1], [0], [0], [1], [0, 0, 1, 1], [], []>} : vector<8x8xf32>, vector<8x256xf32>, vector<8x256xf32> -> vector<8x256xf32>
    %133 = arith.addf %124, %132 : vector<8x256xf32>
    %134 = vector.extract_strided_slice %102 {offsets = [0, 128], sizes = [8, 256], strides = [1, 1]} : vector<8x512xf32> to vector<8x256xf32>
    %135 = vector.extract_strided_slice %22 {offsets = [4, 0, 0], sizes = [1, 8, 8], strides = [1, 1, 1]} : vector<9x8x8xf32> to vector<1x8x8xf32>
    %136 = vector.shape_cast %135 : vector<1x8x8xf32> to vector<8x8xf32>
    %cst_40 = arith.constant dense<0.000000e+00> : vector<8x256xf32>
    %137 = tpu.matmul %136, %134, %cst_40 {dimension_numbers = #tpu.dot_dimension_numbers<[1], [0], [0], [1], [0, 0, 1, 1], [], []>} : vector<8x8xf32>, vector<8x256xf32>, vector<8x256xf32> -> vector<8x256xf32>
    %138 = arith.addf %133, %137 : vector<8x256xf32>
    %139 = vector.extract_strided_slice %102 {offsets = [0, 129], sizes = [8, 256], strides = [1, 1]} : vector<8x512xf32> to vector<8x256xf32>
    %cst_41 = arith.constant 0.000000e+00 : f32
    %140 = vector.broadcast %cst_41 : f32 to vector<8x256xf32>
    %141 = vector.shape_cast %20 : vector<1x256xi1> to vector<1x256xi1>
    %142 = vector.broadcast %141 : vector<1x256xi1> to vector<8x256xi1>
    %143 = arith.select %142, %139, %140 : vector<8x256xi1>, vector<8x256xf32>
    %144 = vector.extract_strided_slice %22 {offsets = [5, 0, 0], sizes = [1, 8, 8], strides = [1, 1, 1]} : vector<9x8x8xf32> to vector<1x8x8xf32>
    %145 = vector.shape_cast %144 : vector<1x8x8xf32> to vector<8x8xf32>
    %cst_42 = arith.constant dense<0.000000e+00> : vector<8x256xf32>
    %146 = tpu.matmul %145, %143, %cst_42 {dimension_numbers = #tpu.dot_dimension_numbers<[1], [0], [0], [1], [0, 0, 1, 1], [], []>} : vector<8x8xf32>, vector<8x256xf32>, vector<8x256xf32> -> vector<8x256xf32>
    %147 = arith.addf %138, %146 : vector<8x256xf32>
    %148 = vector.extract_strided_slice %102 {offsets = [0, 143], sizes = [8, 256], strides = [1, 1]} : vector<8x512xf32> to vector<8x256xf32>
    %cst_43 = arith.constant 0.000000e+00 : f32
    %149 = vector.broadcast %cst_43 : f32 to vector<8x256xf32>
    %150 = vector.shape_cast %18 : vector<1x256xi1> to vector<1x256xi1>
    %151 = vector.broadcast %150 : vector<1x256xi1> to vector<8x256xi1>
    %152 = arith.select %151, %148, %149 : vector<8x256xi1>, vector<8x256xf32>
    %153 = vector.extract_strided_slice %22 {offsets = [6, 0, 0], sizes = [1, 8, 8], strides = [1, 1, 1]} : vector<9x8x8xf32> to vector<1x8x8xf32>
    %154 = vector.shape_cast %153 : vector<1x8x8xf32> to vector<8x8xf32>
    %cst_44 = arith.constant dense<0.000000e+00> : vector<8x256xf32>
    %155 = tpu.matmul %154, %152, %cst_44 {dimension_numbers = #tpu.dot_dimension_numbers<[1], [0], [0], [1], [0, 0, 1, 1], [], []>} : vector<8x8xf32>, vector<8x256xf32>, vector<8x256xf32> -> vector<8x256xf32>
    %156 = arith.addf %147, %155 : vector<8x256xf32>
    %157 = vector.extract_strided_slice %102 {offsets = [0, 144], sizes = [8, 256], strides = [1, 1]} : vector<8x512xf32> to vector<8x256xf32>
    %158 = vector.extract_strided_slice %22 {offsets = [7, 0, 0], sizes = [1, 8, 8], strides = [1, 1, 1]} : vector<9x8x8xf32> to vector<1x8x8xf32>
    %159 = vector.shape_cast %158 : vector<1x8x8xf32> to vector<8x8xf32>
    %cst_45 = arith.constant dense<0.000000e+00> : vector<8x256xf32>
    %160 = tpu.matmul %159, %157, %cst_45 {dimension_numbers = #tpu.dot_dimension_numbers<[1], [0], [0], [1], [0, 0, 1, 1], [], []>} : vector<8x8xf32>, vector<8x256xf32>, vector<8x256xf32> -> vector<8x256xf32>
    %161 = arith.addf %156, %160 : vector<8x256xf32>
    %162 = vector.extract_strided_slice %102 {offsets = [0, 145], sizes = [8, 256], strides = [1, 1]} : vector<8x512xf32> to vector<8x256xf32>
    %cst_46 = arith.constant 0.000000e+00 : f32
    %163 = vector.broadcast %cst_46 : f32 to vector<8x256xf32>
    %164 = vector.shape_cast %20 : vector<1x256xi1> to vector<1x256xi1>
    %165 = vector.broadcast %164 : vector<1x256xi1> to vector<8x256xi1>
    %166 = arith.select %165, %162, %163 : vector<8x256xi1>, vector<8x256xf32>
    %167 = vector.extract_strided_slice %22 {offsets = [8, 0, 0], sizes = [1, 8, 8], strides = [1, 1, 1]} : vector<9x8x8xf32> to vector<1x8x8xf32>
    %168 = vector.shape_cast %167 : vector<1x8x8xf32> to vector<8x8xf32>
    %cst_47 = arith.constant dense<0.000000e+00> : vector<8x256xf32>
    %169 = tpu.matmul %168, %166, %cst_47 {dimension_numbers = #tpu.dot_dimension_numbers<[1], [0], [0], [1], [0, 0, 1, 1], [], []>} : vector<8x8xf32>, vector<8x256xf32>, vector<8x256xf32> -> vector<8x256xf32>
    %170 = arith.addf %161, %169 : vector<8x256xf32>
    %171 = vector.broadcast %24 : vector<8x1xf32> to vector<8x256xf32>
    %172 = arith.addf %170, %171 : vector<8x256xf32>
    %cst_48 = arith.constant 0.000000e+00 : f32
    %173 = vector.broadcast %cst_48 : f32 to vector<8x256xf32>
    %174 = arith.maximumf %172, %173 : vector<8x256xf32>
    %c0_49 = arith.constant 0 : index
    %c0_50 = arith.constant 0 : index
    %c0_51 = arith.constant 0 : index
    %175 = vector.load %arg6[%c0_49, %c0_50, %c0_51] : memref<1x8x256xf32, #tpu.memory_space<vmem>>, vector<1x8x256xf32>
    %176 = vector.shape_cast %175 : vector<1x8x256xf32> to vector<8x256xf32>
    %177 = vector.shape_cast %174 : vector<8x256xf32> to vector<1x8x256xf32>
    tpu.vector_store %arg6[%c0_49, %c0_50, %c0_51], %177 {strides = array<i32>} : memref<1x8x256xf32, #tpu.memory_space<vmem>>, vector<1x8x256xf32>,
    return
  }
  func.func @transform_0(%arg0: i32) -> (i32, i32, i32) {
    %c0_i32 = arith.constant 0 : i32
    %c0_i32_0 = arith.constant 0 : i32
    %c0_i32_1 = arith.constant 0 : i32
    return %arg0, %c0_i32, %c0_i32_0 : i32, i32, i32
  }
  func.func @transform_1(%arg0: i32) -> (i32, i32, i32) {
    %c0_i32 = arith.constant 0 : i32
    %c0_i32_0 = arith.constant 0 : i32
    %c0_i32_1 = arith.constant 0 : i32
    %c0_i32_2 = arith.constant 0 : i32
    return %c0_i32, %c0_i32_0, %c0_i32_1 : i32, i32, i32
  }
  func.func @transform_2(%arg0: i32) -> (i32, i32) {
    %c0_i32 = arith.constant 0 : i32
    %c0_i32_0 = arith.constant 0 : i32
    %c0_i32_1 = arith.constant 0 : i32
    return %c0_i32, %c0_i32_0 : i32, i32
  }
  func.func @transform_3(%arg0: i32) -> (i32, i32, i32) {
    %c0_i32 = arith.constant 0 : i32
    %c0_i32_0 = arith.constant 0 : i32
    %c0_i32_1 = arith.constant 0 : i32
    %c0_i32_2 = arith.constant 0 : i32
    return %c0_i32, %c0_i32_0, %c0_i32_1 : i32, i32, i32
  }
  func.func @transform_4(%arg0: i32) -> (i32, i32) {
    %c0_i32 = arith.constant 0 : i32
    %c0_i32_0 = arith.constant 0 : i32
    %c0_i32_1 = arith.constant 0 : i32
    return %c0_i32, %c0_i32_0 : i32, i32
  }
  func.func @transform_5(%arg0: i32) -> (i32, i32, i32) {
    %c0_i32 = arith.constant 0 : i32
    %c0_i32_0 = arith.constant 0 : i32
    %c0_i32_1 = arith.constant 0 : i32
    return %arg0, %c0_i32, %c0_i32_0 : i32, i32, i32
  }
}

</mosaic_0001>

<llo_original>
// kernel: _conv_block_forward.1
$region0: #{_conv_block_forward.1}
  #allocation0 [shape = 'u32[]', space=smem, size = 0x4, offset = 0x4, fixed_abs, tag = 'smem constant byte address 0x4 - core index']
  #allocation1 [shape = 'u32[144,128]{1,0:T(1,128)}', space=vmem, size = 0x12000, scoped, tag = 'internal scratch']
  %s0 = inlined_call_operand.vmem [shape: f32[2,4,256], index: 0, kind: input, shape index: {}]
  %s1 = inlined_call_operand.vmem [shape: f32[9,8,4], index: 1, kind: input, shape index: {}]
  %s2 = inlined_call_operand.vmem [shape: f32[8,1], index: 2, kind: input, shape index: {}]
  %s3 = inlined_call_operand.vmem [shape: f32[9,8,8], index: 3, kind: input, shape index: {}]
  %s4 = inlined_call_operand.vmem [shape: f32[8,1], index: 4, kind: input, shape index: {}]
  %s5 = inlined_call_operand.vmem [shape: f32[2,8,256], index: 5, kind: output, shape index: {}]
  %s6 = sld [smem:[#allocation0]]
  $region53: #{_conv_block_forward.1} parent=0
    _
  %s8 = ssub.s32 1, %s6
  %s9 = scalar_select 0, %s8, %s6
  loop: start=0, step=1, limit=4
  $region2: #{_conv_block_forward.1} parent=0 // loop_pre_header
    _
  $region3: #{_conv_block_forward.1} parent=0 // loop_header
    %s11 = sphi 0, %s15
    %p12 = scmp.ge.s32.totalorder %s11, 4
    %s21 = sphi 0, %s23
    %s24 = sphi 0, %s21
    %s25 = sphi 0, %s24
    %s41 = sphi 0, %s25
    %s45 = sphi 0, %s45
    %s47 = sphi 0, %s45
    %s48 = sphi 0, %s47
    %s62 = sphi 0, %s48
    %s66 = sphi 0, %s66
    %s68 = sphi 0, %s66
    %s69 = sphi 0, %s68
    %s83 = sphi 0, %s69
    %s87 = sphi 0, %s87
    %s89 = sphi 0, %s87
    %s90 = sphi 0, %s89
    %s104 = sphi 0, %s90
    %s108 = sphi 0, %s108
    %s110 = sphi 0, %s108
    %s111 = sphi 0, %s110
    %s125 = sphi 0, %s111
    %s131 = sphi 0, %s133
    %s134 = sphi 0, %s131
    %s135 = sphi 0, %s134
    %s151 = sphi 0, %s135
  $region4: #{_conv_block_forward.1} parent=0 // loop_header_branch
    %14 = sbr.rel (%p12) target = $region8
  $region5: #{_conv_block_forward.1} parent=0 // loop_body
    %s16 = ssub.s32 %s11, 1
    %s17 = ssub.s32 %s11, 2
    %s18 = sadd.s32 %s11, 1
    %s19 = ssub.s32 %s11, %s18
    %p20 = scmp.eq.s32.totalorder %s19, 0
    %s22 = sadd.s32 %s21, 1
    %s23 = scalar_select %p20, %s21, %s22
    %p26 = pneg %p20
    %p27 = scmp.eq.s32.totalorder %s11, 1
    %p28 = por %p26, %p27
    %p29 = scmp.ne.s32.totalorder %s21, %s24
    %p30 = scmp.eq.s32.totalorder %s11, 0
    %p31 = por %p29, %p30
    %p32 = scmp.ne.s32.totalorder %s21, %s24
    %p33 = scmp.eq.s32.totalorder %s16, 1
    %p34 = por %p32, %p33
    %p35 = scmp.ne.s32.totalorder %s24, %s25
    %p36 = scmp.eq.s32.totalorder %s16, 0
    %p37 = por %p35, %p36
    %p38 = scmp.ne.s32.totalorder %s24, %s25
    %p39 = scmp.eq.s32.totalorder %s17, 1
    %p40 = por %p38, %p39
    %p42 = scmp.ne.s32.totalorder %s25, %s41
    %p43 = scmp.eq.s32.totalorder %s17, 0
    %p44 = por %p42, %p43
    %s46 = sadd.s32 %s45, 1
    %p49 = scmp.eq.s32.totalorder %s11, 1
    %p50 = scmp.ne.s32.totalorder %s45, %s47
    %p51 = scmp.eq.s32.totalorder %s11, 0
    %p52 = por %p50, %p51
    %p53 = scmp.ne.s32.totalorder %s45, %s47
    %p54 = scmp.eq.s32.totalorder %s16, 1
    %p55 = por %p53, %p54
    %p56 = scmp.ne.s32.totalorder %s47, %s48
    %p57 = scmp.eq.s32.totalorder %s16, 0
    %p58 = por %p56, %p57
    %p59 = scmp.ne.s32.totalorder %s47, %s48
    %p60 = scmp.eq.s32.totalorder %s17, 1
    %p61 = por %p59, %p60
    %p63 = scmp.ne.s32.totalorder %s48, %s62
    %p64 = scmp.eq.s32.totalorder %s17, 0
    %p65 = por %p63, %p64
    %s67 = sadd.s32 %s66, 1
    %p70 = scmp.eq.s32.totalorder %s11, 1
    %p71 = scmp.ne.s32.totalorder %s66, %s68
    %p72 = scmp.eq.s32.totalorder %s11, 0
    %p73 = por %p71, %p72
    %p74 = scmp.ne.s32.totalorder %s66, %s68
    %p75 = scmp.eq.s32.totalorder %s16, 1
    %p76 = por %p74, %p75
    %p77 = scmp.ne.s32.totalorder %s68, %s69
    %p78 = scmp.eq.s32.totalorder %s16, 0
    %p79 = por %p77, %p78
    %p80 = scmp.ne.s32.totalorder %s68, %s69
    %p81 = scmp.eq.s32.totalorder %s17, 1
    %p82 = por %p80, %p81
    %p84 = scmp.ne.s32.totalorder %s69, %s83
    %p85 = scmp.eq.s32.totalorder %s17, 0
    %p86 = por %p84, %p85
    %s88 = sadd.s32 %s87, 1
    %p91 = scmp.eq.s32.totalorder %s11, 1
    %p92 = scmp.ne.s32.totalorder %s87, %s89
    %p93 = scmp.eq.s32.totalorder %s11, 0
    %p94 = por %p92, %p93
    %p95 = scmp.ne.s32.totalorder %s87, %s89
    %p96 = scmp.eq.s32.totalorder %s16, 1
    %p97 = por %p95, %p96
    %p98 = scmp.ne.s32.totalorder %s89, %s90
    %p99 = scmp.eq.s32.totalorder %s16, 0
    %p100 = por %p98, %p99
    %p101 = scmp.ne.s32.totalorder %s89, %s90
    %p102 = scmp.eq.s32.totalorder %s17, 1
    %p103 = por %p101, %p102
    %p105 = scmp.ne.s32.totalorder %s90, %s104
    %p106 = scmp.eq.s32.totalorder %s17, 0
    %p107 = por %p105, %p106
    %s109 = sadd.s32 %s108, 1
    %p112 = scmp.eq.s32.totalorder %s11, 1
    %p113 = scmp.ne.s32.totalorder %s108, %s110
    %p114 = scmp.eq.s32.totalorder %s11, 0
    %p115 = por %p113, %p114
    %p116 = scmp.ne.s32.totalorder %s108, %s110
    %p117 = scmp.eq.s32.totalorder %s16, 1
    %p118 = por %p116, %p117
    %p119 = scmp.ne.s32.totalorder %s110, %s111
    %p120 = scmp.eq.s32.totalorder %s16, 0
    %p121 = por %p119, %p120
    %p122 = scmp.ne.s32.totalorder %s110, %s111
    %p123 = scmp.eq.s32.totalorder %s17, 1
    %p124 = por %p122, %p123
    %p126 = scmp.ne.s32.totalorder %s111, %s125
    %p127 = scmp.eq.s32.totalorder %s17, 0
    %p128 = por %p126, %p127
    %s129 = ssub.s32 %s11, %s18
    %p130 = scmp.eq.s32.totalorder %s129, 0
    %s132 = sadd.s32 %s131, 1
    %s133 = scalar_select %p130, %s131, %s132
    %p136 = pneg %p130
    %p137 = scmp.eq.s32.totalorder %s11, 1
    %p138 = por %p136, %p137
    %p139 = scmp.ne.s32.totalorder %s131, %s134
    %p140 = scmp.eq.s32.totalorder %s11, 0
    %p141 = por %p139, %p140
    %p142 = scmp.ne.s32.totalorder %s131, %s134
    %p143 = scmp.eq.s32.totalorder %s16, 1
    %p144 = por %p142, %p143
    %p145 = scmp.ne.s32.totalorder %s134, %s135
    %p146 = scmp.eq.s32.totalorder %s16, 0
    %p147 = por %p145, %p146
    %p148 = scmp.ne.s32.totalorder %s134, %s135
    %p149 = scmp.eq.s32.totalorder %s17, 1
    %p150 = por %p148, %p149
    %p152 = scmp.ne.s32.totalorder %s135, %s151
    %p153 = scmp.eq.s32.totalorder %s17, 0
    %p154 = por %p152, %p153
    %p155 = scmp.le.s32.totalorder 1, %s11
    %p156 = scmp.lt.s32.totalorder %s11, 3
    %p157 = pnand %p155, %p156
    %p158 = pneg %p157
    // Predicated region
    $region9: #{_conv_block_forward.1} parent=5 // pred_check
      _
    $region10: #{_conv_block_forward.1} parent=5 // pred_check_branch
      %160 = sbr.rel (%p157) target = $region12
    $region11: #{_conv_block_forward.1} parent=5 // pred_region
      %s161 = ssub.s32 %s11, 1
      // Predicated region
      $region13: #{_conv_block_forward.1} parent=11 // pred_check
        %p162 = pneg %p58
      $region14: #{_conv_block_forward.1} parent=11 // pred_check_branch
        %164 = sbr.rel (%p162) target = $region16
      $region15: #{_conv_block_forward.1} parent=11 // pred_region
        _
      $region16: #{_conv_block_forward.1} parent=11 // pred_fallthru
        _
      // Predicated region
      $region17: #{_conv_block_forward.1} parent=11 // pred_check
        %p165 = pneg %p79
      $region18: #{_conv_block_forward.1} parent=11 // pred_check_branch
        %167 = sbr.rel (%p165) target = $region20
      $region19: #{_conv_block_forward.1} parent=11 // pred_region
        _
      $region20: #{_conv_block_forward.1} parent=11 // pred_fallthru
        _
      // Predicated region
      $region21: #{_conv_block_forward.1} parent=11 // pred_check
        %p168 = pneg %p100
      $region22: #{_conv_block_forward.1} parent=11 // pred_check_branch
        %170 = sbr.rel (%p168) target = $region24
      $region23: #{_conv_block_forward.1} parent=11 // pred_region
        _
      $region24: #{_conv_block_forward.1} parent=11 // pred_fallthru
        _
      // Predicated region
      $region25: #{_conv_block_forward.1} parent=11 // pred_check
        %p171 = pneg %p121
      $region26: #{_conv_block_forward.1} parent=11 // pred_check_branch
        %173 = sbr.rel (%p171) target = $region28
      $region27: #{_conv_block_forward.1} parent=11 // pred_region
        _
      $region28: #{_conv_block_forward.1} parent=11 // pred_fallthru
        _
    $region12: #{_conv_block_forward.1} parent=5 // pred_fallthru
      _
    %p174 = scmp.lt.s32.totalorder %s11, 2
    // Predicated region
    $region29: #{_conv_block_forward.1} parent=5 // pred_check
      %p175 = pneg %p174
    $region30: #{_conv_block_forward.1} parent=5 // pred_check_branch
      %177 = sbr.rel (%p175) target = $region32
    $region31: #{_conv_block_forward.1} parent=5 // pred_region
      // Predicated region
      $region33: #{_conv_block_forward.1} parent=31 // pred_check
        %p178 = pneg %p31
      $region34: #{_conv_block_forward.1} parent=31 // pred_check_branch
        %180 = sbr.rel (%p178) target = $region36
      $region35: #{_conv_block_forward.1} parent=31 // pred_region
        %p181 = scmp.lt.s32.totalorder %s11, 1
        %s182 = scalar_select %p181, %s11, 1
        %s183 = smul.addr %s182, 2
        %s184 = smul.addr %s183, 4
        %s185 = scalar_lea.vmem %s0, %s184
      $region36: #{_conv_block_forward.1} parent=31 // pred_fallthru
        _
    $region32: #{_conv_block_forward.1} parent=5 // pred_fallthru
      _
    %p186 = scmp.le.s32.totalorder 1, %s11
    %p187 = scmp.lt.s32.totalorder %s11, 3
    %p188 = pnand %p186, %p187
    %p189 = pneg %p188
    // Predicated region
    $region37: #{_conv_block_forward.1} parent=5 // pred_check
      _
    $region38: #{_conv_block_forward.1} parent=5 // pred_check_branch
      %191 = sbr.rel (%p188) target = $region40
    $region39: #{_conv_block_forward.1} parent=5 // pred_region
      %s192 = ssub.s32 %s11, 1
      %p193 = scmp.lt.s32.totalorder %s16, 1
      %s194 = scalar_select %p193, %s16, 1
      %s195 = smul.addr %s194, 2
      %s196 = smul.addr %s195, 4
      %s197 = scalar_lea.vmem %s0, %s196
      %p198 = pneg %p37
      %p199 = pneg %p34
      %p200 = pneg %p58
      %p201 = pneg %p55
      %p202 = pneg %p79
      %p203 = pneg %p76
      %p204 = pneg %p100
      %p205 = pneg %p97
      %p206 = pneg %p121
      %p207 = pneg %p118
      %p208 = pneg %p147
      %p209 = pneg %p144
      %p210 = scmp.lt.s32.totalorder %s16, 1
      %s211 = scalar_select %p210, %s16, 1
      %s212 = smul.addr %s211, 2
      %s213 = smul.addr %s212, 8
      %s214 = scalar_lea.vmem %s5, %s213
      %p215 = scmp.lt.s32.totalorder %s16, 1
      %s216 = scalar_select %p215, %s16, 1
      %s217 = smul.addr %s216, 2
      %s218 = smul.addr %s217, 4
      %s219 = scalar_lea.vmem %s0, %s218
      %p220 = scmp.lt.s32.totalorder %s16, 1
      %s221 = scalar_select %p220, %s16, 1
      %s222 = smul.addr %s221, 2
      %s223 = smul.addr %s222, 8
      %s224 = scalar_lea.vmem %s5, %s223
      %v225 = vlaneseq
      %v226 = vand.u32 %v225, 127
      %v227 = vadd.s32 %v226, 128
      %vm228 = vcmp.lt.s32.totalorder %v226, 0
      %v229 = vsub.s32 0, %v226
      %v230 = vsel %vm228, %v229, %v226
      %v231 = vshrl.u32 %v230, 4
      %v232 = vand.u32 %v230, 15
      %v233 = vsub.s32 0, %v232
      %v234 = vsel %vm228, %v233, %v232
      %vm235 = vcmp.lt.s32.totalorder %v227, 0
      %v236 = vsub.s32 0, %v227
      %v237 = vsel %vm235, %v236, %v227
      %v238 = vshrl.u32 %v237, 4
      %v239 = vand.u32 %v237, 15
      %v240 = vsub.s32 0, %v239
      %v241 = vsel %vm235, %v240, %v239
      %vm242 = vcmp.ne.s32.totalorder %v234, 0
      %vm243 = vcmp.ne.s32.totalorder %v241, 0
      %vm244 = vcmp.lt.s32.totalorder %v234, 0
      %vm245 = vcmp.lt.s32.totalorder %v241, 0
      %vm246 = vmand %vm244, %vm242
      %vm247 = vmand %vm245, %vm243
      %v248 = vadd.s32 %v234, 16
      %v249 = vadd.s32 %v241, 16
      %v250 = vsel %vm246, %v248, %v234
      %v251 = vsel %vm247, %v249, %v241
      %vm252 = vcmp.gt.s32.totalorder %v250, 0
      %vm253 = vcmp.gt.s32.totalorder %v251, 0
      %vm254 = vcmp.lt.s32.totalorder %v250, 15
      %vm255 = vcmp.lt.s32.totalorder %v251, 15
      %v256 = vld [vmem:[%s1] sm:$0xff]
      %v257 = vld [vmem:[%s1 + $0x8] sm:$0xff]
      %v258 = vld [vmem:[%s1 + $0x10] sm:$0xff]
      %v259 = vld [vmem:[%s1 + $0x18] sm:$0xff]
      %v260 = vld [vmem:[%s1 + $0x20] sm:$0xff]
      %v261 = vld [vmem:[%s1 + $0x28] sm:$0xff]
      %v262 = vld [vmem:[%s1 + $0x30] sm:$0xff]
      %v263 = vld [vmem:[%s1 + $0x38] sm:$0xff]
      %v264 = vld [vmem:[%s1 + $0x40] sm:$0xff]
      %v265 = vld [vmem:[%s3] sm:$0xff]
      %v266 = vld [vmem:[%s3 + $0x8] sm:$0xff]
      %v267 = vld [vmem:[%s3 + $0x10] sm:$0xff]
      %v268 = vld [vmem:[%s3 + $0x18] sm:$0xff]
      %v269 = vld [vmem:[%s3 + $0x20] sm:$0xff]
      %v270 = vld [vmem:[%s3 + $0x28] sm:$0xff]
      %v271 = vld [vmem:[%s3 + $0x30] sm:$0xff]
      %v272 = vld [vmem:[%s3 + $0x38] sm:$0xff]
      %v273 = vld [vmem:[%s3 + $0x40] sm:$0xff]
      %v274 = vld [vmem:[%s2] sm:$0xff]
      %v275 = vld [vmem:[%s4] sm:$0xff]
      %v276 = vld [vmem:[%s219] sm:$0xff]
      %v278 = vcombine.high %v276, %v276
      %v279 = vsel %vm252, 1, 0
      %v280 = vsel %vm253, 1, 0
      %vm281 = vcmp.eq.s32.totalorder %v279, 1
      %vm282 = vcmp.eq.s32.totalorder %v280, 1
      %284 = vrot.lane.b32.xlu0 0.0, 17
      %v285 = vpop.permute.xlu0 %284
      %286 = vrot.lane.b32.xlu0 %v276, 17
      %v287 = vpop.permute.xlu0 %286
      %288 = vrot.lane.b32.xlu0 %v278, 17
      %v289 = vpop.permute.xlu0 %288
      %vm290 = vcmask 138240
      %v291 = vsel %vm290, %v285, %v287
      %v292 = vsel %vm290, %v287, %v289
      %v295 = vsel %vm281, %v291, 0.0
      %v296 = vsel %vm282, %v292, 0.0
      %297 = vrot.lane.b32.xlu0 0.0, 16
      %v298 = vpop.permute.xlu0 %297
      %299 = vrot.lane.b32.xlu0 %v276, 16
      %v300 = vpop.permute.xlu0 %299
      %301 = vrot.lane.b32.xlu0 %v278, 16
      %v302 = vpop.permute.xlu0 %301
      %vm303 = vcmask 130048
      %v304 = vsel %vm303, %v298, %v300
      %v305 = vsel %vm303, %v300, %v302
      %vm306 = vcmask 31744
      %v308 = vsel %vm306, %v257, 0
      %vm310 = vcmask 1043456
      %v311 = vsel %vm310, %v304, 0
      %v313 = vsel %vm310, %v305, 0
      %315 = vmatprep.subr.mxu0 0.0
      %316 = vmatpush1.msra.mxu0 0.0
      %317 = vmatprep.subr.mxu0 0.0
      %318 = vmatpush1.msra.mxu0 0.0
      %319 = vmatprep.subr.mxu0 0.0
      %320 = vmatpush1.msra.mxu0 0.0
      %321 = vmatprep.subr.mxu0 0.0
      %322 = vmatpush1.msra.mxu0 0.0
      %323 = vmatprep.subr.mxu0 0.0
      %324 = vmatpush1.msra.mxu0 0.0
      %325 = vmatprep.subr.mxu0 0.0
      %326 = vmatpush1.msra.mxu0 0.0
      %327 = vmatprep.subr.mxu0 0.0
      %328 = vmatpush1.msra.mxu0 0.0
      %329 = vmatprep.subr.mxu0 0.0
      %330 = vmatpush1.msra.mxu0 0.0
      %331 = vmatprep.subr.mxu0 0.0
      %332 = vmatpush1.msra.mxu0 0.0
      %333 = vmatprep.subr.mxu0 0.0
      %334 = vmatpush1.msra.mxu0 0.0
      %335 = vmatprep.subr.mxu0 0.0
      %336 = vmatpush1.msra.mxu0 0.0
      %337 = vmatprep.subr.mxu0 0.0
      %338 = vmatpush1.msra.mxu0 0.0
      %339 = vmatprep.subr.mxu0 0.0
      %340 = vmatpush1.msra.mxu0 0.0
      %341 = vmatprep.subr.mxu0 0.0
      %342 = vmatpush1.msra.mxu0 0.0
      %343 = vmatprep.subr.mxu0 0.0
      %344 = vmatpush1.msra.mxu0 0.0
      %345 = vmatprep.subr.mxu0 %v313
      %346 = vmatpush1.msra.mxu0 %v311
      %347 = vmatprep.subr.mxu0 0.0
      %348 = vmatpush2.msra.mxu0 0.0
      %349 = vmatprep.subr.mxu0 0.0
      %350 = vmatpush2.msra.mxu0 0.0
      %351 = vmatprep.subr.mxu0 0.0
      %352 = vmatpush2.msra.mxu0 0.0
      %353 = vmatprep.subr.mxu0 0.0
      %354 = vmatpush2.msra.mxu0 0.0
      %355 = vmatprep.subr.mxu0 0.0
      %356 = vmatpush2.msra.mxu0 0.0
      %357 = vmatprep.subr.mxu0 0.0
      %358 = vmatpush2.msra.mxu0 0.0
      %359 = vmatprep.subr.mxu0 0.0
      %360 = vmatpush2.msra.mxu0 0.0
      %361 = vmatprep.subr.mxu0 0.0
      %362 = vmatpush2.msra.mxu0 0.0
      %363 = vmatprep.subr.mxu0 0.0
      %364 = vmatpush2.msra.mxu0 0.0
      %365 = vmatprep.subr.mxu0 0.0
      %366 = vmatpush2.msra.mxu0 0.0
      %367 = vmatprep.subr.mxu0 0.0
      %368 = vmatpush2.msra.mxu0 0.0
      %369 = vmatprep.subr.mxu0 0.0
      %370 = vmatpush2.msra.mxu0 0.0
      %371 = vmatprep.subr.mxu0 0.0
      %372 = vmatpush2.msra.mxu0 0.0
      %373 = vmatprep.subr.mxu0 0.0
      %374 = vmatpush2.msra.mxu0 0.0
      %375 = vmatprep.subr.mxu0 0.0
      %376 = vmatpush2.msra.mxu0 0.0
      %377 = vmatprep.subr.mxu0 0.0
      %378 = vmatpush2.msra.mxu0 0.0
      %379 = vmatprep.mubr.f32.mxu0 0.0
      %380 = vmatmul.mubr.f32.gmra.mxu0 %v308
      %v381 = vpop.f32.mrf.mxu0
      %v382 = vadd.f32 0.0, %v381
      %v383 = vpop.f32.mrf.mxu0
      %v384 = vadd.f32 0.0, %v383
      %385 = vdwg.mxu0
      %v387 = vsel %vm306, %v256, 0
      %v390 = vsel %vm310, %v295, 0
      %v393 = vsel %vm310, %v296, 0
      %395 = vmatprep.subr.mxu0 0.0
      %396 = vmatpush1.msra.mxu0 0.0
      %397 = vmatprep.subr.mxu0 0.0
      %398 = vmatpush1.msra.mxu0 0.0
      %399 = vmatprep.subr.mxu0 0.0
      %400 = vmatpush1.msra.mxu0 0.0
      %401 = vmatprep.subr.mxu0 0.0
      %402 = vmatpush1.msra.mxu0 0.0
      %403 = vmatprep.subr.mxu0 0.0
      %404 = vmatpush1.msra.mxu0 0.0
      %405 = vmatprep.subr.mxu0 0.0
      %406 = vmatpush1.msra.mxu0 0.0
      %407 = vmatprep.subr.mxu0 0.0
      %408 = vmatpush1.msra.mxu0 0.0
      %409 = vmatprep.subr.mxu0 0.0
      %410 = vmatpush1.msra.mxu0 0.0
      %411 = vmatprep.subr.mxu0 0.0
      %412 = vmatpush1.msra.mxu0 0.0
      %413 = vmatprep.subr.mxu0 0.0
      %414 = vmatpush1.msra.mxu0 0.0
      %415 = vmatprep.subr.mxu0 0.0
      %416 = vmatpush1.msra.mxu0 0.0
      %417 = vmatprep.subr.mxu0 0.0
      %418 = vmatpush1.msra.mxu0 0.0
      %419 = vmatprep.subr.mxu0 0.0
      %420 = vmatpush1.msra.mxu0 0.0
      %421 = vmatprep.subr.mxu0 0.0
      %422 = vmatpush1.msra.mxu0 0.0
      %423 = vmatprep.subr.mxu0 0.0
      %424 = vmatpush1.msra.mxu0 0.0
      %425 = vmatprep.subr.mxu0 %v393
      %426 = vmatpush1.msra.mxu0 %v390
      %427 = vmatprep.subr.mxu0 0.0
      %428 = vmatpush2.msra.mxu0 0.0
      %429 = vmatprep.subr.mxu0 0.0
      %430 = vmatpush2.msra.mxu0 0.0
      %431 = vmatprep.subr.mxu0 0.0
      %432 = vmatpush2.msra.mxu0 0.0
      %433 = vmatprep.subr.mxu0 0.0
      %434 = vmatpush2.msra.mxu0 0.0
      %435 = vmatprep.subr.mxu0 0.0
      %436 = vmatpush2.msra.mxu0 0.0
      %437 = vmatprep.subr.mxu0 0.0
      %438 = vmatpush2.msra.mxu0 0.0
      %439 = vmatprep.subr.mxu0 0.0
      %440 = vmatpush2.msra.mxu0 0.0
      %441 = vmatprep.subr.mxu0 0.0
      %442 = vmatpush2.msra.mxu0 0.0
      %443 = vmatprep.subr.mxu0 0.0
      %444 = vmatpush2.msra.mxu0 0.0
      %445 = vmatprep.subr.mxu0 0.0
      %446 = vmatpush2.msra.mxu0 0.0
      %447 = vmatprep.subr.mxu0 0.0
      %448 = vmatpush2.msra.mxu0 0.0
      %449 = vmatprep.subr.mxu0 0.0
      %450 = vmatpush2.msra.mxu0 0.0
      %451 = vmatprep.subr.mxu0 0.0
      %452 = vmatpush2.msra.mxu0 0.0
      %453 = vmatprep.subr.mxu0 0.0
      %454 = vmatpush2.msra.mxu0 0.0
      %455 = vmatprep.subr.mxu0 0.0
      %456 = vmatpush2.msra.mxu0 0.0
      %457 = vmatprep.subr.mxu0 0.0
      %458 = vmatpush2.msra.mxu0 0.0
      %459 = vmatprep.mubr.f32.mxu0 0.0
      %460 = vmatmul.mubr.f32.gmra.mxu0 %v387
      %v461 = vpop.f32.mrf.mxu0
      %v462 = vadd.f32 %v382, %v461
      %v463 = vpop.f32.mrf.mxu0
      %v464 = vadd.f32 %v384, %v463
      %465 = vdwg.mxu0
      %v466 = vsel %vm254, 1, 0
      %v467 = vsel %vm255, 1, 0
      %vm468 = vcmp.eq.s32.totalorder %v466, 1
      %vm469 = vcmp.eq.s32.totalorder %v467, 1
      %470 = vrot.lane.b32.xlu0 0.0, 15
      %v471 = vpop.permute.xlu0 %470
      %472 = vrot.lane.b32.xlu0 %v276, 15
      %v473 = vpop.permute.xlu0 %472
      %474 = vrot.lane.b32.xlu0 %v278, 15
      %v475 = vpop.permute.xlu0 %474
      %vm476 = vcmask 121856
      %v477 = vsel %vm476, %v471, %v473
      %v478 = vsel %vm476, %v473, %v475
      %v481 = vsel %vm468, %v477, 0.0
      %v482 = vsel %vm469, %v478, 0.0
      %v484 = vsel %vm306, %v258, 0
      %v487 = vsel %vm310, %v481, 0
      %v490 = vsel %vm310, %v482, 0
      %492 = vmatprep.subr.mxu0 0.0
      %493 = vmatpush1.msra.mxu0 0.0
      %494 = vmatprep.subr.mxu0 0.0
      %495 = vmatpush1.msra.mxu0 0.0
      %496 = vmatprep.subr.mxu0 0.0
      %497 = vmatpush1.msra.mxu0 0.0
      %498 = vmatprep.subr.mxu0 0.0
      %499 = vmatpush1.msra.mxu0 0.0
      %500 = vmatprep.subr.mxu0 0.0
      %501 = vmatpush1.msra.mxu0 0.0
      %502 = vmatprep.subr.mxu0 0.0
      %503 = vmatpush1.msra.mxu0 0.0
      %504 = vmatprep.subr.mxu0 0.0
      %505 = vmatpush1.msra.mxu0 0.0
      %506 = vmatprep.subr.mxu0 0.0
      %507 = vmatpush1.msra.mxu0 0.0
      %508 = vmatprep.subr.mxu0 0.0
      %509 = vmatpush1.msra.mxu0 0.0
      %510 = vmatprep.subr.mxu0 0.0
      %511 = vmatpush1.msra.mxu0 0.0
      %512 = vmatprep.subr.mxu0 0.0
      %513 = vmatpush1.msra.mxu0 0.0
      %514 = vmatprep.subr.mxu0 0.0
      %515 = vmatpush1.msra.mxu0 0.0
      %516 = vmatprep.subr.mxu0 0.0
      %517 = vmatpush1.msra.mxu0 0.0
      %518 = vmatprep.subr.mxu0 0.0
      %519 = vmatpush1.msra.mxu0 0.0
      %520 = vmatprep.subr.mxu0 0.0
      %521 = vmatpush1.msra.mxu0 0.0
      %522 = vmatprep.subr.mxu0 %v490
      %523 = vmatpush1.msra.mxu0 %v487
      %524 = vmatprep.subr.mxu0 0.0
      %525 = vmatpush2.msra.mxu0 0.0
      %526 = vmatprep.subr.mxu0 0.0
      %527 = vmatpush2.msra.mxu0 0.0
      %528 = vmatprep.subr.mxu0 0.0
      %529 = vmatpush2.msra.mxu0 0.0
      %530 = vmatprep.subr.mxu0 0.0
      %531 = vmatpush2.msra.mxu0 0.0
      %532 = vmatprep.subr.mxu0 0.0
      %533 = vmatpush2.msra.mxu0 0.0
      %534 = vmatprep.subr.mxu0 0.0
      %535 = vmatpush2.msra.mxu0 0.0
      %536 = vmatprep.subr.mxu0 0.0
      %537 = vmatpush2.msra.mxu0 0.0
      %538 = vmatprep.subr.mxu0 0.0
      %539 = vmatpush2.msra.mxu0 0.0
      %540 = vmatprep.subr.mxu0 0.0
      %541 = vmatpush2.msra.mxu0 0.0
      %542 = vmatprep.subr.mxu0 0.0
      %543 = vmatpush2.msra.mxu0 0.0
      %544 = vmatprep.subr.mxu0 0.0
      %545 = vmatpush2.msra.mxu0 0.0
      %546 = vmatprep.subr.mxu0 0.0
      %547 = vmatpush2.msra.mxu0 0.0
      %548 = vmatprep.subr.mxu0 0.0
      %549 = vmatpush2.msra.mxu0 0.0
      %550 = vmatprep.subr.mxu0 0.0
      %551 = vmatpush2.msra.mxu0 0.0
      %552 = vmatprep.subr.mxu0 0.0
      %553 = vmatpush2.msra.mxu0 0.0
      %554 = vmatprep.subr.mxu0 0.0
      %555 = vmatpush2.msra.mxu0 0.0
      %556 = vmatprep.mubr.f32.mxu0 0.0
      %557 = vmatmul.mubr.f32.gmra.mxu0 %v484
      %v558 = vpop.f32.mrf.mxu0
      %v559 = vadd.f32 0.0, %v558
      %v560 = vpop.f32.mrf.mxu0
      %v561 = vadd.f32 0.0, %v560
      %562 = vdwg.mxu0
      %v563 = vadd.f32 %v462, %v559
      %v564 = vadd.f32 %v464, %v561
      %565 = vrot.lane.b32.xlu0 0.0, 1
      %v566 = vpop.permute.xlu0 %565
      %567 = vrot.lane.b32.xlu0 %v276, 1
      %v568 = vpop.permute.xlu0 %567
      %569 = vrot.lane.b32.xlu0 %v278, 1
      %v570 = vpop.permute.xlu0 %569
      %vm571 = vcmask 7168
      %v572 = vsel %vm571, %v566, %v568
      %v573 = vsel %vm571, %v568, %v570
      %v576 = vsel %vm281, %v572, 0.0
      %v577 = vsel %vm282, %v573, 0.0
      %v579 = vsel %vm306, %v259, 0
      %v582 = vsel %vm310, %v576, 0
      %v585 = vsel %vm310, %v577, 0
      %587 = vmatprep.subr.mxu0 0.0
      %588 = vmatpush1.msra.mxu0 0.0
      %589 = vmatprep.subr.mxu0 0.0
      %590 = vmatpush1.msra.mxu0 0.0
      %591 = vmatprep.subr.mxu0 0.0
      %592 = vmatpush1.msra.mxu0 0.0
      %593 = vmatprep.subr.mxu0 0.0
      %594 = vmatpush1.msra.mxu0 0.0
      %595 = vmatprep.subr.mxu0 0.0
      %596 = vmatpush1.msra.mxu0 0.0
      %597 = vmatprep.subr.mxu0 0.0
      %598 = vmatpush1.msra.mxu0 0.0
      %599 = vmatprep.subr.mxu0 0.0
      %600 = vmatpush1.msra.mxu0 0.0
      %601 = vmatprep.subr.mxu0 0.0
      %602 = vmatpush1.msra.mxu0 0.0
      %603 = vmatprep.subr.mxu0 0.0
      %604 = vmatpush1.msra.mxu0 0.0
      %605 = vmatprep.subr.mxu0 0.0
      %606 = vmatpush1.msra.mxu0 0.0
      %607 = vmatprep.subr.mxu0 0.0
      %608 = vmatpush1.msra.mxu0 0.0
      %609 = vmatprep.subr.mxu0 0.0
      %610 = vmatpush1.msra.mxu0 0.0
      %611 = vmatprep.subr.mxu0 0.0
      %612 = vmatpush1.msra.mxu0 0.0
      %613 = vmatprep.subr.mxu0 0.0
      %614 = vmatpush1.msra.mxu0 0.0
      %615 = vmatprep.subr.mxu0 0.0
      %616 = vmatpush1.msra.mxu0 0.0
      %617 = vmatprep.subr.mxu0 %v585
      %618 = vmatpush1.msra.mxu0 %v582
      %619 = vmatprep.subr.mxu0 0.0
      %620 = vmatpush2.msra.mxu0 0.0
      %621 = vmatprep.subr.mxu0 0.0
      %622 = vmatpush2.msra.mxu0 0.0
      %623 = vmatprep.subr.mxu0 0.0
      %624 = vmatpush2.msra.mxu0 0.0
      %625 = vmatprep.subr.mxu0 0.0
      %626 = vmatpush2.msra.mxu0 0.0
      %627 = vmatprep.subr.mxu0 0.0
      %628 = vmatpush2.msra.mxu0 0.0
      %629 = vmatprep.subr.mxu0 0.0
      %630 = vmatpush2.msra.mxu0 0.0
      %631 = vmatprep.subr.mxu0 0.0
      %632 = vmatpush2.msra.mxu0 0.0
      %633 = vmatprep.subr.mxu0 0.0
      %634 = vmatpush2.msra.mxu0 0.0
      %635 = vmatprep.subr.mxu0 0.0
      %636 = vmatpush2.msra.mxu0 0.0
      %637 = vmatprep.subr.mxu0 0.0
      %638 = vmatpush2.msra.mxu0 0.0
      %639 = vmatprep.subr.mxu0 0.0
      %640 = vmatpush2.msra.mxu0 0.0
      %641 = vmatprep.subr.mxu0 0.0
      %642 = vmatpush2.msra.mxu0 0.0
      %643 = vmatprep.subr.mxu0 0.0
      %644 = vmatpush2.msra.mxu0 0.0
      %645 = vmatprep.subr.mxu0 0.0
      %646 = vmatpush2.msra.mxu0 0.0
      %647 = vmatprep.subr.mxu0 0.0
      %648 = vmatpush2.msra.mxu0 0.0
      %649 = vmatprep.subr.mxu0 0.0
      %650 = vmatpush2.msra.mxu0 0.0
      %651 = vmatprep.mubr.f32.mxu0 0.0
      %652 = vmatmul.mubr.f32.gmra.mxu0 %v579
      %v653 = vpop.f32.mrf.mxu0
      %v654 = vadd.f32 0.0, %v653
      %v655 = vpop.f32.mrf.mxu0
      %v656 = vadd.f32 0.0, %v655
      %657 = vdwg.mxu0
      %v658 = vadd.f32 %v563, %v654
      %v659 = vadd.f32 %v564, %v656
      %v661 = vsel %vm306, %v260, 0
      %v663 = vsel %vm310, %v276, 0
      %v665 = vsel %vm310, %v278, 0
      %667 = vmatprep.subr.mxu0 0.0
      %668 = vmatpush1.msra.mxu0 0.0
      %669 = vmatprep.subr.mxu0 0.0
      %670 = vmatpush1.msra.mxu0 0.0
      %671 = vmatprep.subr.mxu0 0.0
      %672 = vmatpush1.msra.mxu0 0.0
      %673 = vmatprep.subr.mxu0 0.0
      %674 = vmatpush1.msra.mxu0 0.0
      %675 = vmatprep.subr.mxu0 0.0
      %676 = vmatpush1.msra.mxu0 0.0
      %677 = vmatprep.subr.mxu0 0.0
      %678 = vmatpush1.msra.mxu0 0.0
      %679 = vmatprep.subr.mxu0 0.0
      %680 = vmatpush1.msra.mxu0 0.0
      %681 = vmatprep.subr.mxu0 0.0
      %682 = vmatpush1.msra.mxu0 0.0
      %683 = vmatprep.subr.mxu0 0.0
      %684 = vmatpush1.msra.mxu0 0.0
      %685 = vmatprep.subr.mxu0 0.0
      %686 = vmatpush1.msra.mxu0 0.0
      %687 = vmatprep.subr.mxu0 0.0
      %688 = vmatpush1.msra.mxu0 0.0
      %689 = vmatprep.subr.mxu0 0.0
      %690 = vmatpush1.msra.mxu0 0.0
      %691 = vmatprep.subr.mxu0 0.0
      %692 = vmatpush1.msra.mxu0 0.0
      %693 = vmatprep.subr.mxu0 0.0
      %694 = vmatpush1.msra.mxu0 0.0
      %695 = vmatprep.subr.mxu0 0.0
      %696 = vmatpush1.msra.mxu0 0.0
      %697 = vmatprep.subr.mxu0 %v665
      %698 = vmatpush1.msra.mxu0 %v663
      %699 = vmatprep.subr.mxu0 0.0
      %700 = vmatpush2.msra.mxu0 0.0
      %701 = vmatprep.subr.mxu0 0.0
      %702 = vmatpush2.msra.mxu0 0.0
      %703 = vmatprep.subr.mxu0 0.0
      %704 = vmatpush2.msra.mxu0 0.0
      %705 = vmatprep.subr.mxu0 0.0
      %706 = vmatpush2.msra.mxu0 0.0
      %707 = vmatprep.subr.mxu0 0.0
      %708 = vmatpush2.msra.mxu0 0.0
      %709 = vmatprep.subr.mxu0 0.0
      %710 = vmatpush2.msra.mxu0 0.0
      %711 = vmatprep.subr.mxu0 0.0
      %712 = vmatpush2.msra.mxu0 0.0
      %713 = vmatprep.subr.mxu0 0.0
      %714 = vmatpush2.msra.mxu0 0.0
      %715 = vmatprep.subr.mxu0 0.0
      %716 = vmatpush2.msra.mxu0 0.0
      %717 = vmatprep.subr.mxu0 0.0
      %718 = vmatpush2.msra.mxu0 0.0
      %719 = vmatprep.subr.mxu0 0.0
      %720 = vmatpush2.msra.mxu0 0.0
      %721 = vmatprep.subr.mxu0 0.0
      %722 = vmatpush2.msra.mxu0 0.0
      %723 = vmatprep.subr.mxu0 0.0
      %724 = vmatpush2.msra.mxu0 0.0
      %725 = vmatprep.subr.mxu0 0.0
      %726 = vmatpush2.msra.mxu0 0.0
      %727 = vmatprep.subr.mxu0 0.0
      %728 = vmatpush2.msra.mxu0 0.0
      %729 = vmatprep.subr.mxu0 0.0
      %730 = vmatpush2.msra.mxu0 0.0
      %731 = vmatprep.mubr.f32.mxu0 0.0
      %732 = vmatmul.mubr.f32.gmra.mxu0 %v661
      %v733 = vpop.f32.mrf.mxu0
      %v734 = vadd.f32 0.0, %v733
      %v735 = vpop.f32.mrf.mxu0
      %v736 = vadd.f32 0.0, %v735
      %737 = vdwg.mxu0
      %v738 = vadd.f32 %v658, %v734
      %v739 = vadd.f32 %v659, %v736
      %740 = vrot.lane.b32.xlu0 %v276, 127
      %v741 = vpop.permute.xlu0 %740
      %742 = vrot.lane.b32.xlu0 %v278, 127
      %v743 = vpop.permute.xlu0 %742
      %744 = vrot.lane.b32.xlu0 0.0, 127
      %v745 = vpop.permute.xlu0 %744
      %vm746 = vcmask 1039360
      %v747 = vsel %vm746, %v741, %v743
      %v748 = vsel %vm746, %v743, %v745
      %v751 = vsel %vm468, %v747, 0.0
      %v752 = vsel %vm469, %v748, 0.0
      %v754 = vsel %vm306, %v261, 0
      %v757 = vsel %vm310, %v751, 0
      %v760 = vsel %vm310, %v752, 0
      %762 = vmatprep.subr.mxu0 0.0
      %763 = vmatpush1.msra.mxu0 0.0
      %764 = vmatprep.subr.mxu0 0.0
      %765 = vmatpush1.msra.mxu0 0.0
      %766 = vmatprep.subr.mxu0 0.0
      %767 = vmatpush1.msra.mxu0 0.0
      %768 = vmatprep.subr.mxu0 0.0
      %769 = vmatpush1.msra.mxu0 0.0
      %770 = vmatprep.subr.mxu0 0.0
      %771 = vmatpush1.msra.mxu0 0.0
      %772 = vmatprep.subr.mxu0 0.0
      %773 = vmatpush1.msra.mxu0 0.0
      %774 = vmatprep.subr.mxu0 0.0
      %775 = vmatpush1.msra.mxu0 0.0
      %776 = vmatprep.subr.mxu0 0.0
      %777 = vmatpush1.msra.mxu0 0.0
      %778 = vmatprep.subr.mxu0 0.0
      %779 = vmatpush1.msra.mxu0 0.0
      %780 = vmatprep.subr.mxu0 0.0
      %781 = vmatpush1.msra.mxu0 0.0
      %782 = vmatprep.subr.mxu0 0.0
      %783 = vmatpush1.msra.mxu0 0.0
      %784 = vmatprep.subr.mxu0 0.0
      %785 = vmatpush1.msra.mxu0 0.0
      %786 = vmatprep.subr.mxu0 0.0
      %787 = vmatpush1.msra.mxu0 0.0
      %788 = vmatprep.subr.mxu0 0.0
      %789 = vmatpush1.msra.mxu0 0.0
      %790 = vmatprep.subr.mxu0 0.0
      %791 = vmatpush1.msra.mxu0 0.0
      %792 = vmatprep.subr.mxu0 %v760
      %793 = vmatpush1.msra.mxu0 %v757
      %794 = vmatprep.subr.mxu0 0.0
      %795 = vmatpush2.msra.mxu0 0.0
      %796 = vmatprep.subr.mxu0 0.0
      %797 = vmatpush2.msra.mxu0 0.0
      %798 = vmatprep.subr.mxu0 0.0
      %799 = vmatpush2.msra.mxu0 0.0
      %800 = vmatprep.subr.mxu0 0.0
      %801 = vmatpush2.msra.mxu0 0.0
      %802 = vmatprep.subr.mxu0 0.0
      %803 = vmatpush2.msra.mxu0 0.0
      %804 = vmatprep.subr.mxu0 0.0
      %805 = vmatpush2.msra.mxu0 0.0
      %806 = vmatprep.subr.mxu0 0.0
      %807 = vmatpush2.msra.mxu0 0.0
      %808 = vmatprep.subr.mxu0 0.0
      %809 = vmatpush2.msra.mxu0 0.0
      %810 = vmatprep.subr.mxu0 0.0
      %811 = vmatpush2.msra.mxu0 0.0
      %812 = vmatprep.subr.mxu0 0.0
      %813 = vmatpush2.msra.mxu0 0.0
      %814 = vmatprep.subr.mxu0 0.0
      %815 = vmatpush2.msra.mxu0 0.0
      %816 = vmatprep.subr.mxu0 0.0
      %817 = vmatpush2.msra.mxu0 0.0
      %818 = vmatprep.subr.mxu0 0.0
      %819 = vmatpush2.msra.mxu0 0.0
      %820 = vmatprep.subr.mxu0 0.0
      %821 = vmatpush2.msra.mxu0 0.0
      %822 = vmatprep.subr.mxu0 0.0
      %823 = vmatpush2.msra.mxu0 0.0
      %824 = vmatprep.subr.mxu0 0.0
      %825 = vmatpush2.msra.mxu0 0.0
      %826 = vmatprep.mubr.f32.mxu0 0.0
      %827 = vmatmul.mubr.f32.gmra.mxu0 %v754
      %v828 = vpop.f32.mrf.mxu0
      %v829 = vadd.f32 0.0, %v828
      %v830 = vpop.f32.mrf.mxu0
      %v831 = vadd.f32 0.0, %v830
      %832 = vdwg.mxu0
      %v833 = vadd.f32 %v738, %v829
      %v834 = vadd.f32 %v739, %v831
      %835 = vrot.lane.b32.xlu0 %v276, 113
      %v836 = vpop.permute.xlu0 %835
      %837 = vrot.lane.b32.xlu0 %v278, 113
      %v838 = vpop.permute.xlu0 %837
      %839 = vrot.lane.b32.xlu0 0.0, 113
      %v840 = vpop.permute.xlu0 %839
      %vm841 = vcmask 924672
      %v842 = vsel %vm841, %v836, %v838
      %v843 = vsel %vm841, %v838, %v840
      %v846 = vsel %vm281, %v842, 0.0
      %v847 = vsel %vm282, %v843, 0.0
      %v849 = vsel %vm306, %v262, 0
      %v852 = vsel %vm310, %v846, 0
      %v855 = vsel %vm310, %v847, 0
      %857 = vmatprep.subr.mxu0 0.0
      %858 = vmatpush1.msra.mxu0 0.0
      %859 = vmatprep.subr.mxu0 0.0
      %860 = vmatpush1.msra.mxu0 0.0
      %861 = vmatprep.subr.mxu0 0.0
      %862 = vmatpush1.msra.mxu0 0.0
      %863 = vmatprep.subr.mxu0 0.0
      %864 = vmatpush1.msra.mxu0 0.0
      %865 = vmatprep.subr.mxu0 0.0
      %866 = vmatpush1.msra.mxu0 0.0
      %867 = vmatprep.subr.mxu0 0.0
      %868 = vmatpush1.msra.mxu0 0.0
      %869 = vmatprep.subr.mxu0 0.0
      %870 = vmatpush1.msra.mxu0 0.0
      %871 = vmatprep.subr.mxu0 0.0
      %872 = vmatpush1.msra.mxu0 0.0
      %873 = vmatprep.subr.mxu0 0.0
      %874 = vmatpush1.msra.mxu0 0.0
      %875 = vmatprep.subr.mxu0 0.0
      %876 = vmatpush1.msra.mxu0 0.0
      %877 = vmatprep.subr.mxu0 0.0
      %878 = vmatpush1.msra.mxu0 0.0
      %879 = vmatprep.subr.mxu0 0.0
      %880 = vmatpush1.msra.mxu0 0.0
      %881 = vmatprep.subr.mxu0 0.0
      %882 = vmatpush1.msra.mxu0 0.0
      %883 = vmatprep.subr.mxu0 0.0
      %884 = vmatpush1.msra.mxu0 0.0
      %885 = vmatprep.subr.mxu0 0.0
      %886 = vmatpush1.msra.mxu0 0.0
      %887 = vmatprep.subr.mxu0 %v855
      %888 = vmatpush1.msra.mxu0 %v852
      %889 = vmatprep.subr.mxu0 0.0
      %890 = vmatpush2.msra.mxu0 0.0
      %891 = vmatprep.subr.mxu0 0.0
      %892 = vmatpush2.msra.mxu0 0.0
      %893 = vmatprep.subr.mxu0 0.0
      %894 = vmatpush2.msra.mxu0 0.0
      %895 = vmatprep.subr.mxu0 0.0
      %896 = vmatpush2.msra.mxu0 0.0
      %897 = vmatprep.subr.mxu0 0.0
      %898 = vmatpush2.msra.mxu0 0.0
      %899 = vmatprep.subr.mxu0 0.0
      %900 = vmatpush2.msra.mxu0 0.0
      %901 = vmatprep.subr.mxu0 0.0
      %902 = vmatpush2.msra.mxu0 0.0
      %903 = vmatprep.subr.mxu0 0.0
      %904 = vmatpush2.msra.mxu0 0.0
      %905 = vmatprep.subr.mxu0 0.0
      %906 = vmatpush2.msra.mxu0 0.0
      %907 = vmatprep.subr.mxu0 0.0
      %908 = vmatpush2.msra.mxu0 0.0
      %909 = vmatprep.subr.mxu0 0.0
      %910 = vmatpush2.msra.mxu0 0.0
      %911 = vmatprep.subr.mxu0 0.0
      %912 = vmatpush2.msra.mxu0 0.0
      %913 = vmatprep.subr.mxu0 0.0
      %914 = vmatpush2.msra.mxu0 0.0
      %915 = vmatprep.subr.mxu0 0.0
      %916 = vmatpush2.msra.mxu0 0.0
      %917 = vmatprep.subr.mxu0 0.0
      %918 = vmatpush2.msra.mxu0 0.0
      %919 = vmatprep.subr.mxu0 0.0
      %920 = vmatpush2.msra.mxu0 0.0
      %921 = vmatprep.mubr.f32.mxu0 0.0
      %922 = vmatmul.mubr.f32.gmra.mxu0 %v849
      %v923 = vpop.f32.mrf.mxu0
      %v924 = vadd.f32 0.0, %v923
      %v925 = vpop.f32.mrf.mxu0
      %v926 = vadd.f32 0.0, %v925
      %927 = vdwg.mxu0
      %v928 = vadd.f32 %v833, %v924
      %v929 = vadd.f32 %v834, %v926
      %930 = vrot.lane.b32.xlu0 %v276, 112
      %v931 = vpop.permute.xlu0 %930
      %932 = vrot.lane.b32.xlu0 %v278, 112
      %v933 = vpop.permute.xlu0 %932
      %934 = vrot.lane.b32.xlu0 0.0, 112
      %v935 = vpop.permute.xlu0 %934
      %vm936 = vcmask 916480
      %v937 = vsel %vm936, %v931, %v933
      %v938 = vsel %vm936, %v933, %v935
      %v940 = vsel %vm306, %v263, 0
      %v942 = vsel %vm310, %v937, 0
      %v944 = vsel %vm310, %v938, 0
      %946 = vmatprep.subr.mxu0 0.0
      %947 = vmatpush1.msra.mxu0 0.0
      %948 = vmatprep.subr.mxu0 0.0
      %949 = vmatpush1.msra.mxu0 0.0
      %950 = vmatprep.subr.mxu0 0.0
      %951 = vmatpush1.msra.mxu0 0.0
      %952 = vmatprep.subr.mxu0 0.0
      %953 = vmatpush1.msra.mxu0 0.0
      %954 = vmatprep.subr.mxu0 0.0
      %955 = vmatpush1.msra.mxu0 0.0
      %956 = vmatprep.subr.mxu0 0.0
      %957 = vmatpush1.msra.mxu0 0.0
      %958 = vmatprep.subr.mxu0 0.0
      %959 = vmatpush1.msra.mxu0 0.0
      %960 = vmatprep.subr.mxu0 0.0
      %961 = vmatpush1.msra.mxu0 0.0
      %962 = vmatprep.subr.mxu0 0.0
      %963 = vmatpush1.msra.mxu0 0.0
      %964 = vmatprep.subr.mxu0 0.0
      %965 = vmatpush1.msra.mxu0 0.0
      %966 = vmatprep.subr.mxu0 0.0
      %967 = vmatpush1.msra.mxu0 0.0
      %968 = vmatprep.subr.mxu0 0.0
      %969 = vmatpush1.msra.mxu0 0.0
      %970 = vmatprep.subr.mxu0 0.0
      %971 = vmatpush1.msra.mxu0 0.0
      %972 = vmatprep.subr.mxu0 0.0
      %973 = vmatpush1.msra.mxu0 0.0
      %974 = vmatprep.subr.mxu0 0.0
      %975 = vmatpush1.msra.mxu0 0.0
      %976 = vmatprep.subr.mxu0 %v944
      %977 = vmatpush1.msra.mxu0 %v942
      %978 = vmatprep.subr.mxu0 0.0
      %979 = vmatpush2.msra.mxu0 0.0
      %980 = vmatprep.subr.mxu0 0.0
      %981 = vmatpush2.msra.mxu0 0.0
      %982 = vmatprep.subr.mxu0 0.0
      %983 = vmatpush2.msra.mxu0 0.0
      %984 = vmatprep.subr.mxu0 0.0
      %985 = vmatpush2.msra.mxu0 0.0
      %986 = vmatprep.subr.mxu0 0.0
      %987 = vmatpush2.msra.mxu0 0.0
      %988 = vmatprep.subr.mxu0 0.0
      %989 = vmatpush2.msra.mxu0 0.0
      %990 = vmatprep.subr.mxu0 0.0
      %991 = vmatpush2.msra.mxu0 0.0
      %992 = vmatprep.subr.mxu0 0.0
      %993 = vmatpush2.msra.mxu0 0.0
      %994 = vmatprep.subr.mxu0 0.0
      %995 = vmatpush2.msra.mxu0 0.0
      %996 = vmatprep.subr.mxu0 0.0
      %997 = vmatpush2.msra.mxu0 0.0
      %998 = vmatprep.subr.mxu0 0.0
      %999 = vmatpush2.msra.mxu0 0.0
      %1000 = vmatprep.subr.mxu0 0.0
      %1001 = vmatpush2.msra.mxu0 0.0
      %1002 = vmatprep.subr.mxu0 0.0
      %1003 = vmatpush2.msra.mxu0 0.0
      %1004 = vmatprep.subr.mxu0 0.0
      %1005 = vmatpush2.msra.mxu0 0.0
      %1006 = vmatprep.subr.mxu0 0.0
      %1007 = vmatpush2.msra.mxu0 0.0
      %1008 = vmatprep.subr.mxu0 0.0
      %1009 = vmatpush2.msra.mxu0 0.0
      %1010 = vmatprep.mubr.f32.mxu0 0.0
      %1011 = vmatmul.mubr.f32.gmra.mxu0 %v940
      %v1012 = vpop.f32.mrf.mxu0
      %v1013 = vadd.f32 0.0, %v1012
      %v1014 = vpop.f32.mrf.mxu0
      %v1015 = vadd.f32 0.0, %v1014
      %1016 = vdwg.mxu0
      %v1017 = vadd.f32 %v928, %v1013
      %v1018 = vadd.f32 %v929, %v1015
      %1019 = vrot.lane.b32.xlu0 %v276, 111
      %v1020 = vpop.permute.xlu0 %1019
      %1021 = vrot.lane.b32.xlu0 %v278, 111
      %v1022 = vpop.permute.xlu0 %1021
      %1023 = vrot.lane.b32.xlu0 0.0, 111
      %v1024 = vpop.permute.xlu0 %1023
      %vm1025 = vcmask 908288
      %v1026 = vsel %vm1025, %v1020, %v1022
      %v1027 = vsel %vm1025, %v1022, %v1024
      %v1030 = vsel %vm468, %v1026, 0.0
      %v1031 = vsel %vm469, %v1027, 0.0
      %v1033 = vsel %vm306, %v264, 0
      %v1036 = vsel %vm310, %v1030, 0
      %v1039 = vsel %vm310, %v1031, 0
      %1041 = vmatprep.subr.mxu0 0.0
      %1042 = vmatpush1.msra.mxu0 0.0
      %1043 = vmatprep.subr.mxu0 0.0
      %1044 = vmatpush1.msra.mxu0 0.0
      %1045 = vmatprep.subr.mxu0 0.0
      %1046 = vmatpush1.msra.mxu0 0.0
      %1047 = vmatprep.subr.mxu0 0.0
      %1048 = vmatpush1.msra.mxu0 0.0
      %1049 = vmatprep.subr.mxu0 0.0
      %1050 = vmatpush1.msra.mxu0 0.0
      %1051 = vmatprep.subr.mxu0 0.0
      %1052 = vmatpush1.msra.mxu0 0.0
      %1053 = vmatprep.subr.mxu0 0.0
      %1054 = vmatpush1.msra.mxu0 0.0
      %1055 = vmatprep.subr.mxu0 0.0
      %1056 = vmatpush1.msra.mxu0 0.0
      %1057 = vmatprep.subr.mxu0 0.0
      %1058 = vmatpush1.msra.mxu0 0.0
      %1059 = vmatprep.subr.mxu0 0.0
      %1060 = vmatpush1.msra.mxu0 0.0
      %1061 = vmatprep.subr.mxu0 0.0
      %1062 = vmatpush1.msra.mxu0 0.0
      %1063 = vmatprep.subr.mxu0 0.0
      %1064 = vmatpush1.msra.mxu0 0.0
      %1065 = vmatprep.subr.mxu0 0.0
      %1066 = vmatpush1.msra.mxu0 0.0
      %1067 = vmatprep.subr.mxu0 0.0
      %1068 = vmatpush1.msra.mxu0 0.0
      %1069 = vmatprep.subr.mxu0 0.0
      %1070 = vmatpush1.msra.mxu0 0.0
      %1071 = vmatprep.subr.mxu0 %v1039
      %1072 = vmatpush1.msra.mxu0 %v1036
      %1073 = vmatprep.subr.mxu0 0.0
      %1074 = vmatpush2.msra.mxu0 0.0
      %1075 = vmatprep.subr.mxu0 0.0
      %1076 = vmatpush2.msra.mxu0 0.0
      %1077 = vmatprep.subr.mxu0 0.0
      %1078 = vmatpush2.msra.mxu0 0.0
      %1079 = vmatprep.subr.mxu0 0.0
      %1080 = vmatpush2.msra.mxu0 0.0
      %1081 = vmatprep.subr.mxu0 0.0
      %1082 = vmatpush2.msra.mxu0 0.0
      %1083 = vmatprep.subr.mxu0 0.0
      %1084 = vmatpush2.msra.mxu0 0.0
      %1085 = vmatprep.subr.mxu0 0.0
      %1086 = vmatpush2.msra.mxu0 0.0
      %1087 = vmatprep.subr.mxu0 0.0
      %1088 = vmatpush2.msra.mxu0 0.0
      %1089 = vmatprep.subr.mxu0 0.0
      %1090 = vmatpush2.msra.mxu0 0.0
      %1091 = vmatprep.subr.mxu0 0.0
      %1092 = vmatpush2.msra.mxu0 0.0
      %1093 = vmatprep.subr.mxu0 0.0
      %1094 = vmatpush2.msra.mxu0 0.0
      %1095 = vmatprep.subr.mxu0 0.0
      %1096 = vmatpush2.msra.mxu0 0.0
      %1097 = vmatprep.subr.mxu0 0.0
      %1098 = vmatpush2.msra.mxu0 0.0
      %1099 = vmatprep.subr.mxu0 0.0
      %1100 = vmatpush2.msra.mxu0 0.0
      %1101 = vmatprep.subr.mxu0 0.0
      %1102 = vmatpush2.msra.mxu0 0.0
      %1103 = vmatprep.subr.mxu0 0.0
      %1104 = vmatpush2.msra.mxu0 0.0
      %1105 = vmatprep.mubr.f32.mxu0 0.0
      %1106 = vmatmul.mubr.f32.gmra.mxu0 %v1033
      %v1107 = vpop.f32.mrf.mxu0
      %v1108 = vadd.f32 0.0, %v1107
      %v1109 = vpop.f32.mrf.mxu0
      %v1110 = vadd.f32 0.0, %v1109
      %1111 = vdwg.mxu0
      %v1112 = vadd.f32 %v1017, %v1108
      %v1113 = vadd.f32 %v1018, %v1110
      %1115 = vset.pattern.permute.xlu0 0
      %1116 = vperm.xlu0 %1115, %v274
      %v1117 = vpop.permute.xlu0 %1116
      %v1119 = vadd.f32 %v1112, %v1117
      %v1120 = vadd.f32 %v1113, %v1117
      %v1121 = vmax.f32 %v1119, 0.0
      %v1122 = vmax.f32 %v1120, 0.0
      %1125 = vrot.lane.b32.xlu0 %v1121, 17
      %v1126 = vpop.permute.xlu0 %1125
      %1127 = vrot.lane.b32.xlu0 %v1122, 17
      %v1128 = vpop.permute.xlu0 %1127
      %v1129 = vsel %vm290, %v285, %v1126
      %v1130 = vsel %vm290, %v1126, %v1128
      %v1133 = vsel %vm281, %v1129, 0.0
      %v1134 = vsel %vm282, %v1130, 0.0
      %1135 = vrot.lane.b32.xlu0 %v1121, 16
      %v1136 = vpop.permute.xlu0 %1135
      %1137 = vrot.lane.b32.xlu0 %v1122, 16
      %v1138 = vpop.permute.xlu0 %1137
      %v1139 = vsel %vm303, %v298, %v1136
      %v1140 = vsel %vm303, %v1136, %v1138
      %vm1143 = vcmask 64512
      %v1145 = vsel %vm1143, %v266, 0
      %1147 = vmatprep.subr.mxu0 0.0
      %1148 = vmatpush1.msra.mxu0 0.0
      %1149 = vmatprep.subr.mxu0 0.0
      %1150 = vmatpush1.msra.mxu0 0.0
      %1151 = vmatprep.subr.mxu0 0.0
      %1152 = vmatpush1.msra.mxu0 0.0
      %1153 = vmatprep.subr.mxu0 0.0
      %1154 = vmatpush1.msra.mxu0 0.0
      %1155 = vmatprep.subr.mxu0 0.0
      %1156 = vmatpush1.msra.mxu0 0.0
      %1157 = vmatprep.subr.mxu0 0.0
      %1158 = vmatpush1.msra.mxu0 0.0
      %1159 = vmatprep.subr.mxu0 0.0
      %1160 = vmatpush1.msra.mxu0 0.0
      %1161 = vmatprep.subr.mxu0 0.0
      %1162 = vmatpush1.msra.mxu0 0.0
      %1163 = vmatprep.subr.mxu0 0.0
      %1164 = vmatpush1.msra.mxu0 0.0
      %1165 = vmatprep.subr.mxu0 0.0
      %1166 = vmatpush1.msra.mxu0 0.0
      %1167 = vmatprep.subr.mxu0 0.0
      %1168 = vmatpush1.msra.mxu0 0.0
      %1169 = vmatprep.subr.mxu0 0.0
      %1170 = vmatpush1.msra.mxu0 0.0
      %1171 = vmatprep.subr.mxu0 0.0
      %1172 = vmatpush1.msra.mxu0 0.0
      %1173 = vmatprep.subr.mxu0 0.0
      %1174 = vmatpush1.msra.mxu0 0.0
      %1175 = vmatprep.subr.mxu0 0.0
      %1176 = vmatpush1.msra.mxu0 0.0
      %1177 = vmatprep.subr.mxu0 %v1140
      %1178 = vmatpush1.msra.mxu0 %v1139
      %1179 = vmatprep.subr.mxu0 0.0
      %1180 = vmatpush2.msra.mxu0 0.0
      %1181 = vmatprep.subr.mxu0 0.0
      %1182 = vmatpush2.msra.mxu0 0.0
      %1183 = vmatprep.subr.mxu0 0.0
      %1184 = vmatpush2.msra.mxu0 0.0
      %1185 = vmatprep.subr.mxu0 0.0
      %1186 = vmatpush2.msra.mxu0 0.0
      %1187 = vmatprep.subr.mxu0 0.0
      %1188 = vmatpush2.msra.mxu0 0.0
      %1189 = vmatprep.subr.mxu0 0.0
      %1190 = vmatpush2.msra.mxu0 0.0
      %1191 = vmatprep.subr.mxu0 0.0
      %1192 = vmatpush2.msra.mxu0 0.0
      %1193 = vmatprep.subr.mxu0 0.0
      %1194 = vmatpush2.msra.mxu0 0.0
      %1195 = vmatprep.subr.mxu0 0.0
      %1196 = vmatpush2.msra.mxu0 0.0
      %1197 = vmatprep.subr.mxu0 0.0
      %1198 = vmatpush2.msra.mxu0 0.0
      %1199 = vmatprep.subr.mxu0 0.0
      %1200 = vmatpush2.msra.mxu0 0.0
      %1201 = vmatprep.subr.mxu0 0.0
      %1202 = vmatpush2.msra.mxu0 0.0
      %1203 = vmatprep.subr.mxu0 0.0
      %1204 = vmatpush2.msra.mxu0 0.0
      %1205 = vmatprep.subr.mxu0 0.0
      %1206 = vmatpush2.msra.mxu0 0.0
      %1207 = vmatprep.subr.mxu0 0.0
      %1208 = vmatpush2.msra.mxu0 0.0
      %1209 = vmatprep.subr.mxu0 0.0
      %1210 = vmatpush2.msra.mxu0 0.0
      %1211 = vmatprep.mubr.f32.mxu0 0.0
      %1212 = vmatmul.mubr.f32.gmra.mxu0 %v1145
      %v1213 = vpop.f32.mrf.mxu0
      %v1214 = vadd.f32 0.0, %v1213
      %v1215 = vpop.f32.mrf.mxu0
      %v1216 = vadd.f32 0.0, %v1215
      %1217 = vdwg.mxu0
      %v1219 = vsel %vm1143, %v265, 0
      %1221 = vmatprep.subr.mxu0 0.0
      %1222 = vmatpush1.msra.mxu0 0.0
      %1223 = vmatprep.subr.mxu0 0.0
      %1224 = vmatpush1.msra.mxu0 0.0
      %1225 = vmatprep.subr.mxu0 0.0
      %1226 = vmatpush1.msra.mxu0 0.0
      %1227 = vmatprep.subr.mxu0 0.0
      %1228 = vmatpush1.msra.mxu0 0.0
      %1229 = vmatprep.subr.mxu0 0.0
      %1230 = vmatpush1.msra.mxu0 0.0
      %1231 = vmatprep.subr.mxu0 0.0
      %1232 = vmatpush1.msra.mxu0 0.0
      %1233 = vmatprep.subr.mxu0 0.0
      %1234 = vmatpush1.msra.mxu0 0.0
      %1235 = vmatprep.subr.mxu0 0.0
      %1236 = vmatpush1.msra.mxu0 0.0
      %1237 = vmatprep.subr.mxu0 0.0
      %1238 = vmatpush1.msra.mxu0 0.0
      %1239 = vmatprep.subr.mxu0 0.0
      %1240 = vmatpush1.msra.mxu0 0.0
      %1241 = vmatprep.subr.mxu0 0.0
      %1242 = vmatpush1.msra.mxu0 0.0
      %1243 = vmatprep.subr.mxu0 0.0
      %1244 = vmatpush1.msra.mxu0 0.0
      %1245 = vmatprep.subr.mxu0 0.0
      %1246 = vmatpush1.msra.mxu0 0.0
      %1247 = vmatprep.subr.mxu0 0.0
      %1248 = vmatpush1.msra.mxu0 0.0
      %1249 = vmatprep.subr.mxu0 0.0
      %1250 = vmatpush1.msra.mxu0 0.0
      %1251 = vmatprep.subr.mxu0 %v1134
      %1252 = vmatpush1.msra.mxu0 %v1133
      %1253 = vmatprep.subr.mxu0 0.0
      %1254 = vmatpush2.msra.mxu0 0.0
      %1255 = vmatprep.subr.mxu0 0.0
      %1256 = vmatpush2.msra.mxu0 0.0
      %1257 = vmatprep.subr.mxu0 0.0
      %1258 = vmatpush2.msra.mxu0 0.0
      %1259 = vmatprep.subr.mxu0 0.0
      %1260 = vmatpush2.msra.mxu0 0.0
      %1261 = vmatprep.subr.mxu0 0.0
      %1262 = vmatpush2.msra.mxu0 0.0
      %1263 = vmatprep.subr.mxu0 0.0
      %1264 = vmatpush2.msra.mxu0 0.0
      %1265 = vmatprep.subr.mxu0 0.0
      %1266 = vmatpush2.msra.mxu0 0.0
      %1267 = vmatprep.subr.mxu0 0.0
      %1268 = vmatpush2.msra.mxu0 0.0
      %1269 = vmatprep.subr.mxu0 0.0
      %1270 = vmatpush2.msra.mxu0 0.0
      %1271 = vmatprep.subr.mxu0 0.0
      %1272 = vmatpush2.msra.mxu0 0.0
      %1273 = vmatprep.subr.mxu0 0.0
      %1274 = vmatpush2.msra.mxu0 0.0
      %1275 = vmatprep.subr.mxu0 0.0
      %1276 = vmatpush2.msra.mxu0 0.0
      %1277 = vmatprep.subr.mxu0 0.0
      %1278 = vmatpush2.msra.mxu0 0.0
      %1279 = vmatprep.subr.mxu0 0.0
      %1280 = vmatpush2.msra.mxu0 0.0
      %1281 = vmatprep.subr.mxu0 0.0
      %1282 = vmatpush2.msra.mxu0 0.0
      %1283 = vmatprep.subr.mxu0 0.0
      %1284 = vmatpush2.msra.mxu0 0.0
      %1285 = vmatprep.mubr.f32.mxu0 0.0
      %1286 = vmatmul.mubr.f32.gmra.mxu0 %v1219
      %v1287 = vpop.f32.mrf.mxu0
      %v1288 = vadd.f32 %v1214, %v1287
      %v1289 = vpop.f32.mrf.mxu0
      %v1290 = vadd.f32 %v1216, %v1289
      %1291 = vdwg.mxu0
      %1292 = vrot.lane.b32.xlu0 %v1121, 15
      %v1293 = vpop.permute.xlu0 %1292
      %1294 = vrot.lane.b32.xlu0 %v1122, 15
      %v1295 = vpop.permute.xlu0 %1294
      %v1296 = vsel %vm476, %v471, %v1293
      %v1297 = vsel %vm476, %v1293, %v1295
      %v1300 = vsel %vm468, %v1296, 0.0
      %v1301 = vsel %vm469, %v1297, 0.0
      %v1303 = vsel %vm1143, %v267, 0
      %1305 = vmatprep.subr.mxu0 0.0
      %1306 = vmatpush1.msra.mxu0 0.0
      %1307 = vmatprep.subr.mxu0 0.0
      %1308 = vmatpush1.msra.mxu0 0.0
      %1309 = vmatprep.subr.mxu0 0.0
      %1310 = vmatpush1.msra.mxu0 0.0
      %1311 = vmatprep.subr.mxu0 0.0
      %1312 = vmatpush1.msra.mxu0 0.0
      %1313 = vmatprep.subr.mxu0 0.0
      %1314 = vmatpush1.msra.mxu0 0.0
      %1315 = vmatprep.subr.mxu0 0.0
      %1316 = vmatpush1.msra.mxu0 0.0
      %1317 = vmatprep.subr.mxu0 0.0
      %1318 = vmatpush1.msra.mxu0 0.0
      %1319 = vmatprep.subr.mxu0 0.0
      %1320 = vmatpush1.msra.mxu0 0.0
      %1321 = vmatprep.subr.mxu0 0.0
      %1322 = vmatpush1.msra.mxu0 0.0
      %1323 = vmatprep.subr.mxu0 0.0
      %1324 = vmatpush1.msra.mxu0 0.0
      %1325 = vmatprep.subr.mxu0 0.0
      %1326 = vmatpush1.msra.mxu0 0.0
      %1327 = vmatprep.subr.mxu0 0.0
      %1328 = vmatpush1.msra.mxu0 0.0
      %1329 = vmatprep.subr.mxu0 0.0
      %1330 = vmatpush1.msra.mxu0 0.0
      %1331 = vmatprep.subr.mxu0 0.0
      %1332 = vmatpush1.msra.mxu0 0.0
      %1333 = vmatprep.subr.mxu0 0.0
      %1334 = vmatpush1.msra.mxu0 0.0
      %1335 = vmatprep.subr.mxu0 %v1301
      %1336 = vmatpush1.msra.mxu0 %v1300
      %1337 = vmatprep.subr.mxu0 0.0
      %1338 = vmatpush2.msra.mxu0 0.0
      %1339 = vmatprep.subr.mxu0 0.0
      %1340 = vmatpush2.msra.mxu0 0.0
      %1341 = vmatprep.subr.mxu0 0.0
      %1342 = vmatpush2.msra.mxu0 0.0
      %1343 = vmatprep.subr.mxu0 0.0
      %1344 = vmatpush2.msra.mxu0 0.0
      %1345 = vmatprep.subr.mxu0 0.0
      %1346 = vmatpush2.msra.mxu0 0.0
      %1347 = vmatprep.subr.mxu0 0.0
      %1348 = vmatpush2.msra.mxu0 0.0
      %1349 = vmatprep.subr.mxu0 0.0
      %1350 = vmatpush2.msra.mxu0 0.0
      %1351 = vmatprep.subr.mxu0 0.0
      %1352 = vmatpush2.msra.mxu0 0.0
      %1353 = vmatprep.subr.mxu0 0.0
      %1354 = vmatpush2.msra.mxu0 0.0
      %1355 = vmatprep.subr.mxu0 0.0
      %1356 = vmatpush2.msra.mxu0 0.0
      %1357 = vmatprep.subr.mxu0 0.0
      %1358 = vmatpush2.msra.mxu0 0.0
      %1359 = vmatprep.subr.mxu0 0.0
      %1360 = vmatpush2.msra.mxu0 0.0
      %1361 = vmatprep.subr.mxu0 0.0
      %1362 = vmatpush2.msra.mxu0 0.0
      %1363 = vmatprep.subr.mxu0 0.0
      %1364 = vmatpush2.msra.mxu0 0.0
      %1365 = vmatprep.subr.mxu0 0.0
      %1366 = vmatpush2.msra.mxu0 0.0
      %1367 = vmatprep.subr.mxu0 0.0
      %1368 = vmatpush2.msra.mxu0 0.0
      %1369 = vmatprep.mubr.f32.mxu0 0.0
      %1370 = vmatmul.mubr.f32.gmra.mxu0 %v1303
      %v1371 = vpop.f32.mrf.mxu0
      %v1372 = vadd.f32 0.0, %v1371
      %v1373 = vpop.f32.mrf.mxu0
      %v1374 = vadd.f32 0.0, %v1373
      %1375 = vdwg.mxu0
      %v1376 = vadd.f32 %v1288, %v1372
      %v1377 = vadd.f32 %v1290, %v1374
      %1378 = vrot.lane.b32.xlu0 %v1121, 1
      %v1379 = vpop.permute.xlu0 %1378
      %1380 = vrot.lane.b32.xlu0 %v1122, 1
      %v1381 = vpop.permute.xlu0 %1380
      %v1382 = vsel %vm571, %v566, %v1379
      %v1383 = vsel %vm571, %v1379, %v1381
      %v1386 = vsel %vm281, %v1382, 0.0
      %v1387 = vsel %vm282, %v1383, 0.0
      %v1389 = vsel %vm1143, %v268, 0
      %1391 = vmatprep.subr.mxu0 0.0
      %1392 = vmatpush1.msra.mxu0 0.0
      %1393 = vmatprep.subr.mxu0 0.0
      %1394 = vmatpush1.msra.mxu0 0.0
      %1395 = vmatprep.subr.mxu0 0.0
      %1396 = vmatpush1.msra.mxu0 0.0
      %1397 = vmatprep.subr.mxu0 0.0
      %1398 = vmatpush1.msra.mxu0 0.0
      %1399 = vmatprep.subr.mxu0 0.0
      %1400 = vmatpush1.msra.mxu0 0.0
      %1401 = vmatprep.subr.mxu0 0.0
      %1402 = vmatpush1.msra.mxu0 0.0
      %1403 = vmatprep.subr.mxu0 0.0
      %1404 = vmatpush1.msra.mxu0 0.0
      %1405 = vmatprep.subr.mxu0 0.0
      %1406 = vmatpush1.msra.mxu0 0.0
      %1407 = vmatprep.subr.mxu0 0.0
      %1408 = vmatpush1.msra.mxu0 0.0
      %1409 = vmatprep.subr.mxu0 0.0
      %1410 = vmatpush1.msra.mxu0 0.0
      %1411 = vmatprep.subr.mxu0 0.0
      %1412 = vmatpush1.msra.mxu0 0.0
      %1413 = vmatprep.subr.mxu0 0.0
      %1414 = vmatpush1.msra.mxu0 0.0
      %1415 = vmatprep.subr.mxu0 0.0
      %1416 = vmatpush1.msra.mxu0 0.0
      %1417 = vmatprep.subr.mxu0 0.0
      %1418 = vmatpush1.msra.mxu0 0.0
      %1419 = vmatprep.subr.mxu0 0.0
      %1420 = vmatpush1.msra.mxu0 0.0
      %1421 = vmatprep.subr.mxu0 %v1387
      %1422 = vmatpush1.msra.mxu0 %v1386
      %1423 = vmatprep.subr.mxu0 0.0
      %1424 = vmatpush2.msra.mxu0 0.0
      %1425 = vmatprep.subr.mxu0 0.0
      %1426 = vmatpush2.msra.mxu0 0.0
      %1427 = vmatprep.subr.mxu0 0.0
      %1428 = vmatpush2.msra.mxu0 0.0
      %1429 = vmatprep.subr.mxu0 0.0
      %1430 = vmatpush2.msra.mxu0 0.0
      %1431 = vmatprep.subr.mxu0 0.0
      %1432 = vmatpush2.msra.mxu0 0.0
      %1433 = vmatprep.subr.mxu0 0.0
      %1434 = vmatpush2.msra.mxu0 0.0
      %1435 = vmatprep.subr.mxu0 0.0
      %1436 = vmatpush2.msra.mxu0 0.0
      %1437 = vmatprep.subr.mxu0 0.0
      %1438 = vmatpush2.msra.mxu0 0.0
      %1439 = vmatprep.subr.mxu0 0.0
      %1440 = vmatpush2.msra.mxu0 0.0
      %1441 = vmatprep.subr.mxu0 0.0
      %1442 = vmatpush2.msra.mxu0 0.0
      %1443 = vmatprep.subr.mxu0 0.0
      %1444 = vmatpush2.msra.mxu0 0.0
      %1445 = vmatprep.subr.mxu0 0.0
      %1446 = vmatpush2.msra.mxu0 0.0
      %1447 = vmatprep.subr.mxu0 0.0
      %1448 = vmatpush2.msra.mxu0 0.0
      %1449 = vmatprep.subr.mxu0 0.0
      %1450 = vmatpush2.msra.mxu0 0.0
      %1451 = vmatprep.subr.mxu0 0.0
      %1452 = vmatpush2.msra.mxu0 0.0
      %1453 = vmatprep.subr.mxu0 0.0
      %1454 = vmatpush2.msra.mxu0 0.0
      %1455 = vmatprep.mubr.f32.mxu0 0.0
      %1456 = vmatmul.mubr.f32.gmra.mxu0 %v1389
      %v1457 = vpop.f32.mrf.mxu0
      %v1458 = vadd.f32 0.0, %v1457
      %v1459 = vpop.f32.mrf.mxu0
      %v1460 = vadd.f32 0.0, %v1459
      %1461 = vdwg.mxu0
      %v1462 = vadd.f32 %v1376, %v1458
      %v1463 = vadd.f32 %v1377, %v1460
      %v1465 = vsel %vm1143, %v269, 0
      %1467 = vmatprep.subr.mxu0 0.0
      %1468 = vmatpush1.msra.mxu0 0.0
      %1469 = vmatprep.subr.mxu0 0.0
      %1470 = vmatpush1.msra.mxu0 0.0
      %1471 = vmatprep.subr.mxu0 0.0
      %1472 = vmatpush1.msra.mxu0 0.0
      %1473 = vmatprep.subr.mxu0 0.0
      %1474 = vmatpush1.msra.mxu0 0.0
      %1475 = vmatprep.subr.mxu0 0.0
      %1476 = vmatpush1.msra.mxu0 0.0
      %1477 = vmatprep.subr.mxu0 0.0
      %1478 = vmatpush1.msra.mxu0 0.0
      %1479 = vmatprep.subr.mxu0 0.0
      %1480 = vmatpush1.msra.mxu0 0.0
      %1481 = vmatprep.subr.mxu0 0.0
      %1482 = vmatpush1.msra.mxu0 0.0
      %1483 = vmatprep.subr.mxu0 0.0
      %1484 = vmatpush1.msra.mxu0 0.0
      %1485 = vmatprep.subr.mxu0 0.0
      %1486 = vmatpush1.msra.mxu0 0.0
      %1487 = vmatprep.subr.mxu0 0.0
      %1488 = vmatpush1.msra.mxu0 0.0
      %1489 = vmatprep.subr.mxu0 0.0
      %1490 = vmatpush1.msra.mxu0 0.0
      %1491 = vmatprep.subr.mxu0 0.0
      %1492 = vmatpush1.msra.mxu0 0.0
      %1493 = vmatprep.subr.mxu0 0.0
      %1494 = vmatpush1.msra.mxu0 0.0
      %1495 = vmatprep.subr.mxu0 0.0
      %1496 = vmatpush1.msra.mxu0 0.0
      %1497 = vmatprep.subr.mxu0 %v1122
      %1498 = vmatpush1.msra.mxu0 %v1121
      %1499 = vmatprep.subr.mxu0 0.0
      %1500 = vmatpush2.msra.mxu0 0.0
      %1501 = vmatprep.subr.mxu0 0.0
      %1502 = vmatpush2.msra.mxu0 0.0
      %1503 = vmatprep.subr.mxu0 0.0
      %1504 = vmatpush2.msra.mxu0 0.0
      %1505 = vmatprep.subr.mxu0 0.0
      %1506 = vmatpush2.msra.mxu0 0.0
      %1507 = vmatprep.subr.mxu0 0.0
      %1508 = vmatpush2.msra.mxu0 0.0
      %1509 = vmatprep.subr.mxu0 0.0
      %1510 = vmatpush2.msra.mxu0 0.0
      %1511 = vmatprep.subr.mxu0 0.0
      %1512 = vmatpush2.msra.mxu0 0.0
      %1513 = vmatprep.subr.mxu0 0.0
      %1514 = vmatpush2.msra.mxu0 0.0
      %1515 = vmatprep.subr.mxu0 0.0
      %1516 = vmatpush2.msra.mxu0 0.0
      %1517 = vmatprep.subr.mxu0 0.0
      %1518 = vmatpush2.msra.mxu0 0.0
      %1519 = vmatprep.subr.mxu0 0.0
      %1520 = vmatpush2.msra.mxu0 0.0
      %1521 = vmatprep.subr.mxu0 0.0
      %1522 = vmatpush2.msra.mxu0 0.0
      %1523 = vmatprep.subr.mxu0 0.0
      %1524 = vmatpush2.msra.mxu0 0.0
      %1525 = vmatprep.subr.mxu0 0.0
      %1526 = vmatpush2.msra.mxu0 0.0
      %1527 = vmatprep.subr.mxu0 0.0
      %1528 = vmatpush2.msra.mxu0 0.0
      %1529 = vmatprep.subr.mxu0 0.0
      %1530 = vmatpush2.msra.mxu0 0.0
      %1531 = vmatprep.mubr.f32.mxu0 0.0
      %1532 = vmatmul.mubr.f32.gmra.mxu0 %v1465
      %v1533 = vpop.f32.mrf.mxu0
      %v1534 = vadd.f32 0.0, %v1533
      %v1535 = vpop.f32.mrf.mxu0
      %v1536 = vadd.f32 0.0, %v1535
      %1537 = vdwg.mxu0
      %v1538 = vadd.f32 %v1462, %v1534
      %v1539 = vadd.f32 %v1463, %v1536
      %1540 = vrot.lane.b32.xlu0 %v1121, 127
      %v1541 = vpop.permute.xlu0 %1540
      %1542 = vrot.lane.b32.xlu0 %v1122, 127
      %v1543 = vpop.permute.xlu0 %1542
      %v1544 = vsel %vm746, %v1541, %v1543
      %v1545 = vsel %vm746, %v1543, %v745
      %v1548 = vsel %vm468, %v1544, 0.0
      %v1549 = vsel %vm469, %v1545, 0.0
      %v1551 = vsel %vm1143, %v270, 0
      %1553 = vmatprep.subr.mxu0 0.0
      %1554 = vmatpush1.msra.mxu0 0.0
      %1555 = vmatprep.subr.mxu0 0.0
      %1556 = vmatpush1.msra.mxu0 0.0
      %1557 = vmatprep.subr.mxu0 0.0
      %1558 = vmatpush1.msra.mxu0 0.0
      %1559 = vmatprep.subr.mxu0 0.0
      %1560 = vmatpush1.msra.mxu0 0.0
      %1561 = vmatprep.subr.mxu0 0.0
      %1562 = vmatpush1.msra.mxu0 0.0
      %1563 = vmatprep.subr.mxu0 0.0
      %1564 = vmatpush1.msra.mxu0 0.0
      %1565 = vmatprep.subr.mxu0 0.0
      %1566 = vmatpush1.msra.mxu0 0.0
      %1567 = vmatprep.subr.mxu0 0.0
      %1568 = vmatpush1.msra.mxu0 0.0
      %1569 = vmatprep.subr.mxu0 0.0
      %1570 = vmatpush1.msra.mxu0 0.0
      %1571 = vmatprep.subr.mxu0 0.0
      %1572 = vmatpush1.msra.mxu0 0.0
      %1573 = vmatprep.subr.mxu0 0.0
      %1574 = vmatpush1.msra.mxu0 0.0
      %1575 = vmatprep.subr.mxu0 0.0
      %1576 = vmatpush1.msra.mxu0 0.0
      %1577 = vmatprep.subr.mxu0 0.0
      %1578 = vmatpush1.msra.mxu0 0.0
      %1579 = vmatprep.subr.mxu0 0.0
      %1580 = vmatpush1.msra.mxu0 0.0
      %1581 = vmatprep.subr.mxu0 0.0
      %1582 = vmatpush1.msra.mxu0 0.0
      %1583 = vmatprep.subr.mxu0 %v1549
      %1584 = vmatpush1.msra.mxu0 %v1548
      %1585 = vmatprep.subr.mxu0 0.0
      %1586 = vmatpush2.msra.mxu0 0.0
      %1587 = vmatprep.subr.mxu0 0.0
      %1588 = vmatpush2.msra.mxu0 0.0
      %1589 = vmatprep.subr.mxu0 0.0
      %1590 = vmatpush2.msra.mxu0 0.0
      %1591 = vmatprep.subr.mxu0 0.0
      %1592 = vmatpush2.msra.mxu0 0.0
      %1593 = vmatprep.subr.mxu0 0.0
      %1594 = vmatpush2.msra.mxu0 0.0
      %1595 = vmatprep.subr.mxu0 0.0
      %1596 = vmatpush2.msra.mxu0 0.0
      %1597 = vmatprep.subr.mxu0 0.0
      %1598 = vmatpush2.msra.mxu0 0.0
      %1599 = vmatprep.subr.mxu0 0.0
      %1600 = vmatpush2.msra.mxu0 0.0
      %1601 = vmatprep.subr.mxu0 0.0
      %1602 = vmatpush2.msra.mxu0 0.0
      %1603 = vmatprep.subr.mxu0 0.0
      %1604 = vmatpush2.msra.mxu0 0.0
      %1605 = vmatprep.subr.mxu0 0.0
      %1606 = vmatpush2.msra.mxu0 0.0
      %1607 = vmatprep.subr.mxu0 0.0
      %1608 = vmatpush2.msra.mxu0 0.0
      %1609 = vmatprep.subr.mxu0 0.0
      %1610 = vmatpush2.msra.mxu0 0.0
      %1611 = vmatprep.subr.mxu0 0.0
      %1612 = vmatpush2.msra.mxu0 0.0
      %1613 = vmatprep.subr.mxu0 0.0
      %1614 = vmatpush2.msra.mxu0 0.0
      %1615 = vmatprep.subr.mxu0 0.0
      %1616 = vmatpush2.msra.mxu0 0.0
      %1617 = vmatprep.mubr.f32.mxu0 0.0
      %1618 = vmatmul.mubr.f32.gmra.mxu0 %v1551
      %v1619 = vpop.f32.mrf.mxu0
      %v1620 = vadd.f32 0.0, %v1619
      %v1621 = vpop.f32.mrf.mxu0
      %v1622 = vadd.f32 0.0, %v1621
      %1623 = vdwg.mxu0
      %v1624 = vadd.f32 %v1538, %v1620
      %v1625 = vadd.f32 %v1539, %v1622
      %1626 = vrot.lane.b32.xlu0 %v1121, 113
      %v1627 = vpop.permute.xlu0 %1626
      %1628 = vrot.lane.b32.xlu0 %v1122, 113
      %v1629 = vpop.permute.xlu0 %1628
      %v1630 = vsel %vm841, %v1627, %v1629
      %v1631 = vsel %vm841, %v1629, %v840
      %v1634 = vsel %vm281, %v1630, 0.0
      %v1635 = vsel %vm282, %v1631, 0.0
      %v1637 = vsel %vm1143, %v271, 0
      %1639 = vmatprep.subr.mxu0 0.0
      %1640 = vmatpush1.msra.mxu0 0.0
      %1641 = vmatprep.subr.mxu0 0.0
      %1642 = vmatpush1.msra.mxu0 0.0
      %1643 = vmatprep.subr.mxu0 0.0
      %1644 = vmatpush1.msra.mxu0 0.0
      %1645 = vmatprep.subr.mxu0 0.0
      %1646 = vmatpush1.msra.mxu0 0.0
      %1647 = vmatprep.subr.mxu0 0.0
      %1648 = vmatpush1.msra.mxu0 0.0
      %1649 = vmatprep.subr.mxu0 0.0
      %1650 = vmatpush1.msra.mxu0 0.0
      %1651 = vmatprep.subr.mxu0 0.0
      %1652 = vmatpush1.msra.mxu0 0.0
      %1653 = vmatprep.subr.mxu0 0.0
      %1654 = vmatpush1.msra.mxu0 0.0
      %1655 = vmatprep.subr.mxu0 0.0
      %1656 = vmatpush1.msra.mxu0 0.0
      %1657 = vmatprep.subr.mxu0 0.0
      %1658 = vmatpush1.msra.mxu0 0.0
      %1659 = vmatprep.subr.mxu0 0.0
      %1660 = vmatpush1.msra.mxu0 0.0
      %1661 = vmatprep.subr.mxu0 0.0
      %1662 = vmatpush1.msra.mxu0 0.0
      %1663 = vmatprep.subr.mxu0 0.0
      %1664 = vmatpush1.msra.mxu0 0.0
      %1665 = vmatprep.subr.mxu0 0.0
      %1666 = vmatpush1.msra.mxu0 0.0
      %1667 = vmatprep.subr.mxu0 0.0
      %1668 = vmatpush1.msra.mxu0 0.0
      %1669 = vmatprep.subr.mxu0 %v1635
      %1670 = vmatpush1.msra.mxu0 %v1634
      %1671 = vmatprep.subr.mxu0 0.0
      %1672 = vmatpush2.msra.mxu0 0.0
      %1673 = vmatprep.subr.mxu0 0.0
      %1674 = vmatpush2.msra.mxu0 0.0
      %1675 = vmatprep.subr.mxu0 0.0
      %1676 = vmatpush2.msra.mxu0 0.0
      %1677 = vmatprep.subr.mxu0 0.0
      %1678 = vmatpush2.msra.mxu0 0.0
      %1679 = vmatprep.subr.mxu0 0.0
      %1680 = vmatpush2.msra.mxu0 0.0
      %1681 = vmatprep.subr.mxu0 0.0
      %1682 = vmatpush2.msra.mxu0 0.0
      %1683 = vmatprep.subr.mxu0 0.0
      %1684 = vmatpush2.msra.mxu0 0.0
      %1685 = vmatprep.subr.mxu0 0.0
      %1686 = vmatpush2.msra.mxu0 0.0
      %1687 = vmatprep.subr.mxu0 0.0
      %1688 = vmatpush2.msra.mxu0 0.0
      %1689 = vmatprep.subr.mxu0 0.0
      %1690 = vmatpush2.msra.mxu0 0.0
      %1691 = vmatprep.subr.mxu0 0.0
      %1692 = vmatpush2.msra.mxu0 0.0
      %1693 = vmatprep.subr.mxu0 0.0
      %1694 = vmatpush2.msra.mxu0 0.0
      %1695 = vmatprep.subr.mxu0 0.0
      %1696 = vmatpush2.msra.mxu0 0.0
      %1697 = vmatprep.subr.mxu0 0.0
      %1698 = vmatpush2.msra.mxu0 0.0
      %1699 = vmatprep.subr.mxu0 0.0
      %1700 = vmatpush2.msra.mxu0 0.0
      %1701 = vmatprep.subr.mxu0 0.0
      %1702 = vmatpush2.msra.mxu0 0.0
      %1703 = vmatprep.mubr.f32.mxu0 0.0
      %1704 = vmatmul.mubr.f32.gmra.mxu0 %v1637
      %v1705 = vpop.f32.mrf.mxu0
      %v1706 = vadd.f32 0.0, %v1705
      %v1707 = vpop.f32.mrf.mxu0
      %v1708 = vadd.f32 0.0, %v1707
      %1709 = vdwg.mxu0
      %v1710 = vadd.f32 %v1624, %v1706
      %v1711 = vadd.f32 %v1625, %v1708
      %1712 = vrot.lane.b32.xlu0 %v1121, 112
      %v1713 = vpop.permute.xlu0 %1712
      %1714 = vrot.lane.b32.xlu0 %v1122, 112
      %v1715 = vpop.permute.xlu0 %1714
      %v1716 = vsel %vm936, %v1713, %v1715
      %v1717 = vsel %vm936, %v1715, %v935
      %v1721 = vsel %vm1143, %v272, 0
      %1723 = vmatprep.subr.mxu0 0.0
      %1724 = vmatpush1.msra.mxu0 0.0
      %1725 = vmatprep.subr.mxu0 0.0
      %1726 = vmatpush1.msra.mxu0 0.0
      %1727 = vmatprep.subr.mxu0 0.0
      %1728 = vmatpush1.msra.mxu0 0.0
      %1729 = vmatprep.subr.mxu0 0.0
      %1730 = vmatpush1.msra.mxu0 0.0
      %1731 = vmatprep.subr.mxu0 0.0
      %1732 = vmatpush1.msra.mxu0 0.0
      %1733 = vmatprep.subr.mxu0 0.0
      %1734 = vmatpush1.msra.mxu0 0.0
      %1735 = vmatprep.subr.mxu0 0.0
      %1736 = vmatpush1.msra.mxu0 0.0
      %1737 = vmatprep.subr.mxu0 0.0
      %1738 = vmatpush1.msra.mxu0 0.0
      %1739 = vmatprep.subr.mxu0 0.0
      %1740 = vmatpush1.msra.mxu0 0.0
      %1741 = vmatprep.subr.mxu0 0.0
      %1742 = vmatpush1.msra.mxu0 0.0
      %1743 = vmatprep.subr.mxu0 0.0
      %1744 = vmatpush1.msra.mxu0 0.0
      %1745 = vmatprep.subr.mxu0 0.0
      %1746 = vmatpush1.msra.mxu0 0.0
      %1747 = vmatprep.subr.mxu0 0.0
      %1748 = vmatpush1.msra.mxu0 0.0
      %1749 = vmatprep.subr.mxu0 0.0
      %1750 = vmatpush1.msra.mxu0 0.0
      %1751 = vmatprep.subr.mxu0 0.0
      %1752 = vmatpush1.msra.mxu0 0.0
      %1753 = vmatprep.subr.mxu0 %v1717
      %1754 = vmatpush1.msra.mxu0 %v1716
      %1755 = vmatprep.subr.mxu0 0.0
      %1756 = vmatpush2.msra.mxu0 0.0
      %1757 = vmatprep.subr.mxu0 0.0
      %1758 = vmatpush2.msra.mxu0 0.0
      %1759 = vmatprep.subr.mxu0 0.0
      %1760 = vmatpush2.msra.mxu0 0.0
      %1761 = vmatprep.subr.mxu0 0.0
      %1762 = vmatpush2.msra.mxu0 0.0
      %1763 = vmatprep.subr.mxu0 0.0
      %1764 = vmatpush2.msra.mxu0 0.0
      %1765 = vmatprep.subr.mxu0 0.0
      %1766 = vmatpush2.msra.mxu0 0.0
      %1767 = vmatprep.subr.mxu0 0.0
      %1768 = vmatpush2.msra.mxu0 0.0
      %1769 = vmatprep.subr.mxu0 0.0
      %1770 = vmatpush2.msra.mxu0 0.0
      %1771 = vmatprep.subr.mxu0 0.0
      %1772 = vmatpush2.msra.mxu0 0.0
      %1773 = vmatprep.subr.mxu0 0.0
      %1774 = vmatpush2.msra.mxu0 0.0
      %1775 = vmatprep.subr.mxu0 0.0
      %1776 = vmatpush2.msra.mxu0 0.0
      %1777 = vmatprep.subr.mxu0 0.0
      %1778 = vmatpush2.msra.mxu0 0.0
      %1779 = vmatprep.subr.mxu0 0.0
      %1780 = vmatpush2.msra.mxu0 0.0
      %1781 = vmatprep.subr.mxu0 0.0
      %1782 = vmatpush2.msra.mxu0 0.0
      %1783 = vmatprep.subr.mxu0 0.0
      %1784 = vmatpush2.msra.mxu0 0.0
      %1785 = vmatprep.subr.mxu0 0.0
      %1786 = vmatpush2.msra.mxu0 0.0
      %1787 = vmatprep.mubr.f32.mxu0 0.0
      %1788 = vmatmul.mubr.f32.gmra.mxu0 %v1721
      %v1789 = vpop.f32.mrf.mxu0
      %v1790 = vadd.f32 0.0, %v1789
      %v1791 = vpop.f32.mrf.mxu0
      %v1792 = vadd.f32 0.0, %v1791
      %1793 = vdwg.mxu0
      %v1794 = vadd.f32 %v1710, %v1790
      %v1795 = vadd.f32 %v1711, %v1792
      %1796 = vrot.lane.b32.xlu0 %v1121, 111
      %v1797 = vpop.permute.xlu0 %1796
      %1798 = vrot.lane.b32.xlu0 %v1122, 111
      %v1799 = vpop.permute.xlu0 %1798
      %v1800 = vsel %vm1025, %v1797, %v1799
      %v1801 = vsel %vm1025, %v1799, %v1024
      %v1804 = vsel %vm468, %v1800, 0.0
      %v1805 = vsel %vm469, %v1801, 0.0
      %v1807 = vsel %vm1143, %v273, 0
      %1809 = vmatprep.subr.mxu0 0.0
      %1810 = vmatpush1.msra.mxu0 0.0
      %1811 = vmatprep.subr.mxu0 0.0
      %1812 = vmatpush1.msra.mxu0 0.0
      %1813 = vmatprep.subr.mxu0 0.0
      %1814 = vmatpush1.msra.mxu0 0.0
      %1815 = vmatprep.subr.mxu0 0.0
      %1816 = vmatpush1.msra.mxu0 0.0
      %1817 = vmatprep.subr.mxu0 0.0
      %1818 = vmatpush1.msra.mxu0 0.0
      %1819 = vmatprep.subr.mxu0 0.0
      %1820 = vmatpush1.msra.mxu0 0.0
      %1821 = vmatprep.subr.mxu0 0.0
      %1822 = vmatpush1.msra.mxu0 0.0
      %1823 = vmatprep.subr.mxu0 0.0
      %1824 = vmatpush1.msra.mxu0 0.0
      %1825 = vmatprep.subr.mxu0 0.0
      %1826 = vmatpush1.msra.mxu0 0.0
      %1827 = vmatprep.subr.mxu0 0.0
      %1828 = vmatpush1.msra.mxu0 0.0
      %1829 = vmatprep.subr.mxu0 0.0
      %1830 = vmatpush1.msra.mxu0 0.0
      %1831 = vmatprep.subr.mxu0 0.0
      %1832 = vmatpush1.msra.mxu0 0.0
      %1833 = vmatprep.subr.mxu0 0.0
      %1834 = vmatpush1.msra.mxu0 0.0
      %1835 = vmatprep.subr.mxu0 0.0
      %1836 = vmatpush1.msra.mxu0 0.0
      %1837 = vmatprep.subr.mxu0 0.0
      %1838 = vmatpush1.msra.mxu0 0.0
      %1839 = vmatprep.subr.mxu0 %v1805
      %1840 = vmatpush1.msra.mxu0 %v1804
      %1841 = vmatprep.subr.mxu0 0.0
      %1842 = vmatpush2.msra.mxu0 0.0
      %1843 = vmatprep.subr.mxu0 0.0
      %1844 = vmatpush2.msra.mxu0 0.0
      %1845 = vmatprep.subr.mxu0 0.0
      %1846 = vmatpush2.msra.mxu0 0.0
      %1847 = vmatprep.subr.mxu0 0.0
      %1848 = vmatpush2.msra.mxu0 0.0
      %1849 = vmatprep.subr.mxu0 0.0
      %1850 = vmatpush2.msra.mxu0 0.0
      %1851 = vmatprep.subr.mxu0 0.0
      %1852 = vmatpush2.msra.mxu0 0.0
      %1853 = vmatprep.subr.mxu0 0.0
      %1854 = vmatpush2.msra.mxu0 0.0
      %1855 = vmatprep.subr.mxu0 0.0
      %1856 = vmatpush2.msra.mxu0 0.0
      %1857 = vmatprep.subr.mxu0 0.0
      %1858 = vmatpush2.msra.mxu0 0.0
      %1859 = vmatprep.subr.mxu0 0.0
      %1860 = vmatpush2.msra.mxu0 0.0
      %1861 = vmatprep.subr.mxu0 0.0
      %1862 = vmatpush2.msra.mxu0 0.0
      %1863 = vmatprep.subr.mxu0 0.0
      %1864 = vmatpush2.msra.mxu0 0.0
      %1865 = vmatprep.subr.mxu0 0.0
      %1866 = vmatpush2.msra.mxu0 0.0
      %1867 = vmatprep.subr.mxu0 0.0
      %1868 = vmatpush2.msra.mxu0 0.0
      %1869 = vmatprep.subr.mxu0 0.0
      %1870 = vmatpush2.msra.mxu0 0.0
      %1871 = vmatprep.subr.mxu0 0.0
      %1872 = vmatpush2.msra.mxu0 0.0
      %1873 = vmatprep.mubr.f32.mxu0 0.0
      %1874 = vmatmul.mubr.f32.gmra.mxu0 %v1807
      %v1875 = vpop.f32.mrf.mxu0
      %v1876 = vadd.f32 0.0, %v1875
      %v1877 = vpop.f32.mrf.mxu0
      %v1878 = vadd.f32 0.0, %v1877
      %1879 = vdwg.mxu0
      %v1880 = vadd.f32 %v1794, %v1876
      %v1881 = vadd.f32 %v1795, %v1878
      %1883 = vset.pattern.permute.xlu0 0
      %1884 = vperm.xlu0 %1883, %v275
      %v1885 = vpop.permute.xlu0 %1884
      %v1887 = vadd.f32 %v1880, %v1885
      %v1888 = vadd.f32 %v1881, %v1885
      %v1889 = vmax.f32 %v1887, 0.0
      %v1890 = vmax.f32 %v1888, 0.0
      %1891 = vst [vmem:[%s224] sm:$0xff] %v1889
      %1892 = vst [vmem:[%s224 + $0x8] sm:$0xff] %v1890
      %p1893 = scmp.lt.s32.totalorder %s16, 1
      %s1894 = scalar_select %p1893, %s16, 1
      %s1895 = smul.addr %s1894, 2
      %s1896 = smul.addr %s1895, 8
      %s1897 = scalar_lea.vmem %s5, %s1896
      // Predicated region
      $region41: #{_conv_block_forward.1} parent=39 // pred_check
        %p1898 = pneg %p144
      $region42: #{_conv_block_forward.1} parent=39 // pred_check_branch
        %1900 = sbr.rel (%p1898) target = $region44
      $region43: #{_conv_block_forward.1} parent=39 // pred_region
        _
      $region44: #{_conv_block_forward.1} parent=39 // pred_fallthru
        _
    $region40: #{_conv_block_forward.1} parent=5 // pred_fallthru
      _
    %p1901 = scmp.le.s32.totalorder 2, %s11
    // Predicated region
    $region45: #{_conv_block_forward.1} parent=5 // pred_check
      %p1902 = pneg %p1901
    $region46: #{_conv_block_forward.1} parent=5 // pred_check_branch
      %1904 = sbr.rel (%p1902) target = $region48
    $region47: #{_conv_block_forward.1} parent=5 // pred_region
      %s1905 = ssub.s32 %s11, 2
      // Predicated region
      $region49: #{_conv_block_forward.1} parent=47 // pred_check
        %p1906 = pneg %p150
      $region50: #{_conv_block_forward.1} parent=47 // pred_check_branch
        %1908 = sbr.rel (%p1906) target = $region52
      $region51: #{_conv_block_forward.1} parent=47 // pred_region
        %p1909 = scmp.lt.s32.totalorder %s17, 1
        %s1910 = scalar_select %p1909, %s17, 1
        %s1911 = smul.addr %s1910, 2
        %s1912 = smul.addr %s1911, 8
        %s1913 = scalar_lea.vmem %s5, %s1912
      $region52: #{_conv_block_forward.1} parent=47 // pred_fallthru
        _
    $region48: #{_conv_block_forward.1} parent=5 // pred_fallthru
      _
  $region6: #{_conv_block_forward.1} parent=0 // loop_footer
    %s15 = sadd.s32 1, %s11
  $region7: #{_conv_block_forward.1} parent=0 // loop_footer_branch
    %10 = sbr.rel target = $region3
  $region8: #{_conv_block_forward.1} parent=0 // loop_exit
    _

</llo_original>
